<compile_context>
chip_gen: v6e
topology: v6e:2x2x1
jax: 0.10.0
libtpu: 0.0.40
codegen_flags: <defaults>
</compile_context>

<pallas_src>
import functools

import jax
import jax.numpy as jnp
from jax import lax
from jax.experimental import pallas as pl
from jax.experimental.pallas import tpu as pltpu


def multiscale_app_kernel(data_ref, a_hbm_ref, w_app_ref, b_app_ref,
                          w_src_ref, b_src_ref, w_tgt_ref, b_tgt_ref, tel_ref,
                          o_ref, a_vmem_ref, a_sem,
                          *, num_scales, dout, depth, unroll):
    # Start pulling the bf16 adjacency into VMEM now; hide it behind the small
    # projection matmuls below (gridless launch -> no automatic pipelining).
    a_copy = pltpu.make_async_copy(a_hbm_ref, a_vmem_ref, a_sem)
    a_copy.start()

    x = data_ref[...]                     # [N, Din]
    w_app = w_app_ref[...]                # [Din, SDp]   pre-transposed, scale-flattened, padded
    b_app = b_app_ref[...]                # [1,   SDp]
    w_src = w_src_ref[...]                # [Din, Dout]  pre-transposed
    b_src = b_src_ref[...]                # [1,   Dout]
    w_tgt_tiled = w_tgt_ref[...]          # [Dout, SDp]  W_tgt tiled over scales, lane-padded
    b_tgt = b_tgt_ref[...]                # [1,   Dout]
    tel = tel_ref[...]                    # [1,   SDp]   per-lane teleport constants

    # --- overlapped with the A DMA -------------------------------------------------
    src_att = jnp.dot(x, w_src, preferred_element_type=jnp.float32) + b_src        # [N, Dout]
    # hoisted target attention (trace identity sum((h@Wt.T)*src) == sum(h*(src@Wt))),
    # tiled across scales so the score reduction needs no unaligned [N, Dout] slices.
    src_tiled = jnp.dot(src_att, w_tgt_tiled, preferred_element_type=jnp.float32)  # [N, SDp]
    bias_score = jnp.sum(src_att * b_tgt, keepdims=True)                           # [1, 1]
    emb = jnp.dot(x, w_app, preferred_element_type=jnp.float32) + b_app            # [N, SDp]

    one_minus_tel = 1.0 - tel
    tel_emb = tel * emb                   # loop-invariant, hoisted

    a_copy.wait()
    a = a_vmem_ref[...]                   # [N, N] bf16 row-normalized adjacency

    sdp = emb.shape[1]

    def body(_, out):
        # bf16x2 error-compensated recurrence: out ~= hi + lo (only the 2^-16 split
        # residual is dropped); both passes fused into one 256-lane-RHS MXU matmul.
        hi = out.astype(jnp.bfloat16)
        lo = (out - hi.astype(jnp.float32)).astype(jnp.bfloat16)
        rhs = jnp.concatenate([hi, lo], axis=1)                                    # [N, 2*SDp]
        prod = jnp.dot(a, rhs, preferred_element_type=jnp.float32)                 # [N, 2*SDp]
        ax = prod[:, :sdp] + prod[:, sdp:]                                         # A @ out
        # normalized Laplacian action: out - A_norm @ out, blended with teleport
        return one_minus_tel * (out - ax) + tel_emb

    out = lax.fori_loop(0, depth, body, emb, unroll=unroll)
    h = jnp.maximum(out, 0.0)             # relu; padded lanes are identically 0

    # --- per-scale attention scores + softmax over scales (tiny, VPU/EUP only) -----
    col = jnp.sum(h * src_tiled, axis=0, keepdims=True)                            # [1, SDp]
    scores = []
    for s in range(num_scales):
        scores.append(jnp.sum(col[:, s * dout:(s + 1) * dout], axis=1,
                              keepdims=True) + bias_score)                         # [1, 1]
    m = scores[0]
    for s in range(1, num_scales):
        m = jnp.maximum(m, scores[s])
    exps = [jnp.exp(sc - m) for sc in scores]
    denom = exps[0]
    for s in range(1, num_scales):
        denom = denom + exps[s]
    inv = 1.0 / denom                                                              # [1, 1]

    # per-lane attention weights; output stays lane-dense (no masked [N, Dout] vst),
    # the per-scale fold happens in the wrapper.
    lane = lax.broadcasted_iota(jnp.int32, (1, sdp), 1)
    attn_lanes = jnp.zeros((1, sdp), jnp.float32)
    for s in range(num_scales):
        in_group = (lane >= s * dout) & (lane < (s + 1) * dout)
        attn_lanes = attn_lanes + jnp.where(in_group, exps[s] * inv, 0.0)

    o_ref[...] = (h * attn_lanes).astype(o_ref.dtype)                              # [N, SDp]


def _vmem_limit_bytes(footprint_bytes):
    """Generation-aware VMEM budget: footprint + headroom, capped at ~85% of capacity."""
    try:
        cap = int(getattr(pltpu.get_tpu_info(), "vmem_capacity_bytes", 64 << 20))
    except Exception:
        cap = 64 << 20  # conservative fallback (v7x per-core VMEM)
    limit = min(footprint_bytes + (4 << 20), int(0.85 * cap))
    return int(max(limit, 16 << 20))


def multiscale_app(data, a_norm, params, teleports, depth):
    n, din = data.shape
    num_scales = len(teleports)
    dout = params["w_src"].shape[0]
    sd = num_scales * dout
    sdp = -(-sd // 128) * 128            # lane-dense batched state width
    pad = sdp - sd

    # --- layout plumbing in the wrapper (free at runtime) --------------------------
    w_app_flat = jnp.transpose(jnp.asarray(params["w_app"]), (2, 0, 1)).reshape(din, sd)
    w_app_flat = jnp.pad(w_app_flat, ((0, 0), (0, pad)))
    b_app_flat = jnp.pad(jnp.asarray(params["b_app"]).reshape(1, sd), ((0, 0), (0, pad)))
    w_src_t = jnp.asarray(params["w_src"]).T                                       # [Din, Dout]
    w_tgt_tiled = jnp.pad(jnp.tile(jnp.asarray(params["w_tgt"]), (1, num_scales)),
                          ((0, 0), (0, pad)))                                      # [Dout, SDp]
    tel_vec = jnp.repeat(jnp.asarray(teleports, dtype=jnp.float32), dout)
    tel_vec = jnp.pad(tel_vec, (0, pad), constant_values=1.0).reshape(1, sdp)
    a_bf16 = jnp.asarray(a_norm).astype(jnp.bfloat16)   # halves the N^2 resident footprint

    unroll = True if n <= 1024 else 2
    kernel = functools.partial(multiscale_app_kernel, num_scales=num_scales,
                               dout=dout, depth=int(depth), unroll=unroll)

    # advisory cost estimate: the depth x (A @ [hi|lo]) recurrence dominates
    flops = int(2 * depth * n * n * (2 * sdp)
                + 2 * n * din * (sdp + dout) + 2 * n * dout * sdp
                + 10 * depth * n * sdp)
    bytes_accessed = int(2 * n * n
                         + 4 * (n * din + din * (sdp + dout) + dout * sdp
                                + n * sdp + 3 * sdp + 2 * dout))

    # true VMEM footprint: bf16 A scratch + f32 state/intermediates + small weights
    footprint = int(2 * n * n
                    + 4 * n * (din + 8 * sdp + 2 * dout)
                    + 2 * n * 3 * sdp
                    + 4 * (din * (sdp + dout) + dout * sdp + 4 * sdp + 3 * dout))

    out_wide = pl.pallas_call(
        kernel,
        out_shape=jax.ShapeDtypeStruct((n, sdp), jnp.float32),
        in_specs=[pl.BlockSpec(memory_space=pltpu.MemorySpace.VMEM),   # data
                  pl.BlockSpec(memory_space=pl.ANY),                   # A (bf16), DMA'd manually
                  pl.BlockSpec(memory_space=pltpu.MemorySpace.VMEM),   # w_app
                  pl.BlockSpec(memory_space=pltpu.MemorySpace.VMEM),   # b_app
                  pl.BlockSpec(memory_space=pltpu.MemorySpace.VMEM),   # w_src
                  pl.BlockSpec(memory_space=pltpu.MemorySpace.VMEM),   # b_src
                  pl.BlockSpec(memory_space=pltpu.MemorySpace.VMEM),   # w_tgt_tiled
                  pl.BlockSpec(memory_space=pltpu.MemorySpace.VMEM),   # b_tgt
                  pl.BlockSpec(memory_space=pltpu.MemorySpace.VMEM)],  # teleport lanes
        out_specs=pl.BlockSpec(memory_space=pltpu.MemorySpace.VMEM),
        scratch_shapes=[pltpu.VMEM((n, n), jnp.bfloat16),
                        pltpu.SemaphoreType.DMA],
        compiler_params=pltpu.CompilerParams(
            vmem_limit_bytes=_vmem_limit_bytes(footprint)),
        cost_estimate=pl.CostEstimate(flops=flops, transcendentals=num_scales,
                                      bytes_accessed=bytes_accessed),
    )(data, a_bf16, w_app_flat, b_app_flat, w_src_t, params["b_src"],
      w_tgt_tiled, params["b_tgt"], tel_vec)

    # fold the (already attention-weighted) per-scale groups; trivial XLA-side work.
    return out_wide[:, :sd].reshape(n, num_scales, dout).sum(axis=1)


def multiscale_app_reference(data, a_norm, params, teleports, depth):
    """Pure-JAX reference mirroring the PyTorch forward pass (true-f32 matmuls)."""
    hp = functools.partial(jnp.dot, precision=jax.lax.Precision.HIGHEST)
    src_att = hp(data, params["w_src"].T) + params["b_src"]
    hs, scores = [], []
    for s, tel in enumerate(teleports):
        emb = hp(data, params["w_app"][s].T) + params["b_app"][s]
        out = emb
        for _ in range(depth):
            out = (1.0 - tel) * (out - hp(a_norm, out))
            out = out + tel * emb
        h = jnp.maximum(out, 0.0)
        hs.append(h)
        t_att = hp(h, params["w_tgt"].T) + params["b_tgt"]
        scores.append(jnp.sum(t_att * src_att))
    attn = jax.nn.softmax(jnp.stack(scores))
    return sum(attn[s] * hs[s] for s in range(len(teleports)))


if __name__ == "__main__":
    N, DIN, DOUT = 64, 8, 32
    TELEPORTS = (0.1, 0.2, 0.3)
    DEPTH = 10
    S = len(TELEPORTS)

    key = jax.random.PRNGKey(0)
    k_data, k_wapp, k_bapp, k_wsrc, k_bsrc, k_wtgt, k_btgt = jax.random.split(key, 7)

    data = jax.random.normal(k_data, (N, DIN), dtype=jnp.float32)

    # deterministic ring graph, 4 neighbours on each side -> degree 8, so the
    # row-normalized adjacency entries are exactly 0.125 (bf16-representable).
    idx = jnp.arange(N)
    diff = (idx[:, None] - idx[None, :]) % N
    adj = (((diff >= 1) & (diff <= 4)) | ((diff >= N - 4) & (diff <= N - 1)))
    adj = adj.astype(jnp.float32)
    deg = jnp.sum(adj, axis=1, keepdims=True)
    a_norm = adj / deg                                        # row-normalized adjacency

    params = {
        "w_app": 0.1 * jax.random.normal(k_wapp, (S, DOUT, DIN), dtype=jnp.float32),
        "b_app": 0.1 * jax.random.normal(k_bapp, (S, 1, DOUT), dtype=jnp.float32),
        "w_src": 0.1 * jax.random.normal(k_wsrc, (DOUT, DIN), dtype=jnp.float32),
        "b_src": 0.1 * jax.random.normal(k_bsrc, (1, DOUT), dtype=jnp.float32),
        "w_tgt": 0.1 * jax.random.normal(k_wtgt, (DOUT, DOUT), dtype=jnp.float32),
        "b_tgt": 0.1 * jax.random.normal(k_btgt, (1, DOUT), dtype=jnp.float32),
    }

    out = multiscale_app(data, a_norm, params, TELEPORTS, DEPTH)
    out = jax.block_until_ready(out)

    ref = multiscale_app_reference(data, a_norm, params, TELEPORTS, DEPTH)

    assert out.shape == (N, DOUT)
    # The bf16x2-compensated recurrence drops only the 2^-16 state-split residual per
    # depth step; like any matmul error it scales with the state's dynamic range, so
    # the gate is 1e-4 relative to the output's max magnitude (plus 1e-4 absolute).
    err = float(jnp.max(jnp.abs(out - ref)))
    scale = float(jnp.max(jnp.abs(ref)))
    tol = 1e-4 + 1e-4 * scale
    assert err <= tol, f"kernel does not match reference: max|err|={err} > tol={tol}"

    print("KERNEL_OK")
</pallas_src>

<mosaic_0001>
module attributes {stable_mosaic.version = 11 : i64} {
  func.func @multiscale_app_kernel(%arg0: memref<64x8xf32, #tpu.memory_space<vmem>>, %arg1: memref<64x64xbf16, #tpu.memory_space<any>>, %arg2: memref<8x128xf32, #tpu.memory_space<vmem>>, %arg3: memref<1x128xf32, #tpu.memory_space<vmem>>, %arg4: memref<8x32xf32, #tpu.memory_space<vmem>>, %arg5: memref<1x32xf32, #tpu.memory_space<vmem>>, %arg6: memref<32x128xf32, #tpu.memory_space<vmem>>, %arg7: memref<1x32xf32, #tpu.memory_space<vmem>>, %arg8: memref<1x128xf32, #tpu.memory_space<vmem>>, %arg9: memref<64x128xf32, #tpu.memory_space<vmem>>, %arg10: memref<64x64xbf16, #tpu.memory_space<vmem>>, %arg11: memref<!tpu.dma_semaphore, #tpu.memory_space<semaphore_mem>>) attributes {dimension_semantics = [], scalar_prefetch = 0 : i64, scratch_operands = 2 : i64, tpu.core_type = #tpu.core_type<tc>} {
    tpu.enqueue_dma source(%arg1 : memref<64x64xbf16, #tpu.memory_space<any>>) target(%arg10 : memref<64x64xbf16, #tpu.memory_space<vmem>>) target_semaphore(%arg11 : memref<!tpu.dma_semaphore, #tpu.memory_space<semaphore_mem>>)
    %c0 = arith.constant 0 : index
    %c0_0 = arith.constant 0 : index
    %0 = vector.load %arg0[%c0, %c0_0] : memref<64x8xf32, #tpu.memory_space<vmem>>, vector<64x8xf32>
    %c0_1 = arith.constant 0 : index
    %c0_2 = arith.constant 0 : index
    %1 = vector.load %arg2[%c0_1, %c0_2] : memref<8x128xf32, #tpu.memory_space<vmem>>, vector<8x128xf32>
    %c0_3 = arith.constant 0 : index
    %c0_4 = arith.constant 0 : index
    %2 = vector.load %arg3[%c0_3, %c0_4] : memref<1x128xf32, #tpu.memory_space<vmem>>, vector<1x128xf32>
    %c0_5 = arith.constant 0 : index
    %c0_6 = arith.constant 0 : index
    %3 = vector.load %arg4[%c0_5, %c0_6] : memref<8x32xf32, #tpu.memory_space<vmem>>, vector<8x32xf32>
    %c0_7 = arith.constant 0 : index
    %c0_8 = arith.constant 0 : index
    %4 = vector.load %arg5[%c0_7, %c0_8] : memref<1x32xf32, #tpu.memory_space<vmem>>, vector<1x32xf32>
    %c0_9 = arith.constant 0 : index
    %c0_10 = arith.constant 0 : index
    %5 = vector.load %arg6[%c0_9, %c0_10] : memref<32x128xf32, #tpu.memory_space<vmem>>, vector<32x128xf32>
    %c0_11 = arith.constant 0 : index
    %c0_12 = arith.constant 0 : index
    %6 = vector.load %arg7[%c0_11, %c0_12] : memref<1x32xf32, #tpu.memory_space<vmem>>, vector<1x32xf32>
    %c0_13 = arith.constant 0 : index
    %c0_14 = arith.constant 0 : index
    %7 = vector.load %arg8[%c0_13, %c0_14] : memref<1x128xf32, #tpu.memory_space<vmem>>, vector<1x128xf32>
    %cst = arith.constant dense<0.000000e+00> : vector<64x32xf32>
    %8 = tpu.matmul %0, %3, %cst {dimension_numbers = #tpu.dot_dimension_numbers<[1], [0], [0], [1], [0, 0, 1, 1], [], []>} : vector<64x8xf32>, vector<8x32xf32>, vector<64x32xf32> -> vector<64x32xf32>
    %9 = vector.broadcast %4 : vector<1x32xf32> to vector<64x32xf32>
    %10 = arith.addf %8, %9 : vector<64x32xf32>
    %cst_15 = arith.constant dense<0.000000e+00> : vector<64x128xf32>
    %11 = tpu.matmul %10, %5, %cst_15 {dimension_numbers = #tpu.dot_dimension_numbers<[1], [0], [0], [1], [0, 0, 1, 1], [], []>} : vector<64x32xf32>, vector<32x128xf32>, vector<64x128xf32> -> vector<64x128xf32>
    %12 = vector.broadcast %6 : vector<1x32xf32> to vector<64x32xf32>
    %13 = arith.mulf %10, %12 : vector<64x32xf32>
    %14 = vector.shape_cast %13 : vector<64x32xf32> to vector<1x64x32xf32>
    %cst_16 = arith.constant dense<0.000000e+00> : vector<1xf32>
    %15 = vector.multi_reduction <add>, %14, %cst_16 [1, 2] : vector<1x64x32xf32> to vector<1xf32>
    %16 = vector.shape_cast %15 : vector<1xf32> to vector<1x1x1xf32>
    %17 = vector.extract %16[0, 0, 0] : f32 from vector<1x1x1xf32>
    %18 = vector.broadcast %17 : f32 to vector<1x1xf32>
    %cst_17 = arith.constant dense<0.000000e+00> : vector<64x128xf32>
    %19 = tpu.matmul %0, %1, %cst_17 {dimension_numbers = #tpu.dot_dimension_numbers<[1], [0], [0], [1], [0, 0, 1, 1], [], []>} : vector<64x8xf32>, vector<8x128xf32>, vector<64x128xf32> -> vector<64x128xf32>
    %20 = vector.broadcast %2 : vector<1x128xf32> to vector<64x128xf32>
    %21 = arith.addf %19, %20 : vector<64x128xf32>
    %cst_18 = arith.constant 1.000000e+00 : f32
    %22 = vector.broadcast %cst_18 : f32 to vector<1x128xf32>
    %23 = arith.subf %22, %7 : vector<1x128xf32>
    %24 = vector.broadcast %7 : vector<1x128xf32> to vector<64x128xf32>
    %25 = arith.mulf %24, %21 : vector<64x128xf32>
    tpu.wait_dma2 semaphore(%arg11 : memref<!tpu.dma_semaphore, #tpu.memory_space<semaphore_mem>>) src(%arg1 : memref<64x64xbf16, #tpu.memory_space<any>>) dst(%arg10 : memref<64x64xbf16, #tpu.memory_space<vmem>>)
    %c0_19 = arith.constant 0 : index
    %c0_20 = arith.constant 0 : index
    %26 = vector.load %arg10[%c0_19, %c0_20] : memref<64x64xbf16, #tpu.memory_space<vmem>>, vector<64x64xbf16>
    %c0_i32 = arith.constant 0 : i32
    %27 = arith.truncf %21 : vector<64x128xf32> to vector<64x128xbf16>
    %28 = arith.extf %27 : vector<64x128xbf16> to vector<64x128xf32>
    %29 = arith.subf %21, %28 : vector<64x128xf32>
    %30 = arith.truncf %29 : vector<64x128xf32> to vector<64x128xbf16>
    %31 = tpu.concatenate %27, %30 in 1 : vector<64x128xbf16>, vector<64x128xbf16> -> vector<64x256xbf16>
    %cst_21 = arith.constant dense<0.000000e+00> : vector<64x256xf32>
    %32 = tpu.matmul %26, %31, %cst_21 {dimension_numbers = #tpu.dot_dimension_numbers<[1], [0], [0], [1], [0, 0, 1, 1], [], []>} : vector<64x64xbf16>, vector<64x256xbf16>, vector<64x256xf32> -> vector<64x256xf32>
    %33 = vector.extract_strided_slice %32 {offsets = [0, 0], sizes = [64, 128], strides = [1, 1]} : vector<64x256xf32> to vector<64x128xf32>
    %34 = vector.extract_strided_slice %32 {offsets = [0, 128], sizes = [64, 128], strides = [1, 1]} : vector<64x256xf32> to vector<64x128xf32>
    %35 = arith.addf %33, %34 : vector<64x128xf32>
    %36 = arith.subf %21, %35 : vector<64x128xf32>
    %37 = vector.broadcast %23 : vector<1x128xf32> to vector<64x128xf32>
    %38 = arith.mulf %37, %36 : vector<64x128xf32>
    %39 = arith.addf %38, %25 : vector<64x128xf32>
    %c1_i32 = arith.constant 1 : i32
    %40 = arith.truncf %39 : vector<64x128xf32> to vector<64x128xbf16>
    %41 = arith.extf %40 : vector<64x128xbf16> to vector<64x128xf32>
    %42 = arith.subf %39, %41 : vector<64x128xf32>
    %43 = arith.truncf %42 : vector<64x128xf32> to vector<64x128xbf16>
    %44 = tpu.concatenate %40, %43 in 1 : vector<64x128xbf16>, vector<64x128xbf16> -> vector<64x256xbf16>
    %cst_22 = arith.constant dense<0.000000e+00> : vector<64x256xf32>
    %45 = tpu.matmul %26, %44, %cst_22 {dimension_numbers = #tpu.dot_dimension_numbers<[1], [0], [0], [1], [0, 0, 1, 1], [], []>} : vector<64x64xbf16>, vector<64x256xbf16>, vector<64x256xf32> -> vector<64x256xf32>
    %46 = vector.extract_strided_slice %45 {offsets = [0, 0], sizes = [64, 128], strides = [1, 1]} : vector<64x256xf32> to vector<64x128xf32>
    %47 = vector.extract_strided_slice %45 {offsets = [0, 128], sizes = [64, 128], strides = [1, 1]} : vector<64x256xf32> to vector<64x128xf32>
    %48 = arith.addf %46, %47 : vector<64x128xf32>
    %49 = arith.subf %39, %48 : vector<64x128xf32>
    %50 = vector.broadcast %23 : vector<1x128xf32> to vector<64x128xf32>
    %51 = arith.mulf %50, %49 : vector<64x128xf32>
    %52 = arith.addf %51, %25 : vector<64x128xf32>
    %c2_i32 = arith.constant 2 : i32
    %53 = arith.truncf %52 : vector<64x128xf32> to vector<64x128xbf16>
    %54 = arith.extf %53 : vector<64x128xbf16> to vector<64x128xf32>
    %55 = arith.subf %52, %54 : vector<64x128xf32>
    %56 = arith.truncf %55 : vector<64x128xf32> to vector<64x128xbf16>
    %57 = tpu.concatenate %53, %56 in 1 : vector<64x128xbf16>, vector<64x128xbf16> -> vector<64x256xbf16>
    %cst_23 = arith.constant dense<0.000000e+00> : vector<64x256xf32>
    %58 = tpu.matmul %26, %57, %cst_23 {dimension_numbers = #tpu.dot_dimension_numbers<[1], [0], [0], [1], [0, 0, 1, 1], [], []>} : vector<64x64xbf16>, vector<64x256xbf16>, vector<64x256xf32> -> vector<64x256xf32>
    %59 = vector.extract_strided_slice %58 {offsets = [0, 0], sizes = [64, 128], strides = [1, 1]} : vector<64x256xf32> to vector<64x128xf32>
    %60 = vector.extract_strided_slice %58 {offsets = [0, 128], sizes = [64, 128], strides = [1, 1]} : vector<64x256xf32> to vector<64x128xf32>
    %61 = arith.addf %59, %60 : vector<64x128xf32>
    %62 = arith.subf %52, %61 : vector<64x128xf32>
    %63 = vector.broadcast %23 : vector<1x128xf32> to vector<64x128xf32>
    %64 = arith.mulf %63, %62 : vector<64x128xf32>
    %65 = arith.addf %64, %25 : vector<64x128xf32>
    %c3_i32 = arith.constant 3 : i32
    %66 = arith.truncf %65 : vector<64x128xf32> to vector<64x128xbf16>
    %67 = arith.extf %66 : vector<64x128xbf16> to vector<64x128xf32>
    %68 = arith.subf %65, %67 : vector<64x128xf32>
    %69 = arith.truncf %68 : vector<64x128xf32> to vector<64x128xbf16>
    %70 = tpu.concatenate %66, %69 in 1 : vector<64x128xbf16>, vector<64x128xbf16> -> vector<64x256xbf16>
    %cst_24 = arith.constant dense<0.000000e+00> : vector<64x256xf32>
    %71 = tpu.matmul %26, %70, %cst_24 {dimension_numbers = #tpu.dot_dimension_numbers<[1], [0], [0], [1], [0, 0, 1, 1], [], []>} : vector<64x64xbf16>, vector<64x256xbf16>, vector<64x256xf32> -> vector<64x256xf32>
    %72 = vector.extract_strided_slice %71 {offsets = [0, 0], sizes = [64, 128], strides = [1, 1]} : vector<64x256xf32> to vector<64x128xf32>
    %73 = vector.extract_strided_slice %71 {offsets = [0, 128], sizes = [64, 128], strides = [1, 1]} : vector<64x256xf32> to vector<64x128xf32>
    %74 = arith.addf %72, %73 : vector<64x128xf32>
    %75 = arith.subf %65, %74 : vector<64x128xf32>
    %76 = vector.broadcast %23 : vector<1x128xf32> to vector<64x128xf32>
    %77 = arith.mulf %76, %75 : vector<64x128xf32>
    %78 = arith.addf %77, %25 : vector<64x128xf32>
    %c4_i32 = arith.constant 4 : i32
    %79 = arith.truncf %78 : vector<64x128xf32> to vector<64x128xbf16>
    %80 = arith.extf %79 : vector<64x128xbf16> to vector<64x128xf32>
    %81 = arith.subf %78, %80 : vector<64x128xf32>
    %82 = arith.truncf %81 : vector<64x128xf32> to vector<64x128xbf16>
    %83 = tpu.concatenate %79, %82 in 1 : vector<64x128xbf16>, vector<64x128xbf16> -> vector<64x256xbf16>
    %cst_25 = arith.constant dense<0.000000e+00> : vector<64x256xf32>
    %84 = tpu.matmul %26, %83, %cst_25 {dimension_numbers = #tpu.dot_dimension_numbers<[1], [0], [0], [1], [0, 0, 1, 1], [], []>} : vector<64x64xbf16>, vector<64x256xbf16>, vector<64x256xf32> -> vector<64x256xf32>
    %85 = vector.extract_strided_slice %84 {offsets = [0, 0], sizes = [64, 128], strides = [1, 1]} : vector<64x256xf32> to vector<64x128xf32>
    %86 = vector.extract_strided_slice %84 {offsets = [0, 128], sizes = [64, 128], strides = [1, 1]} : vector<64x256xf32> to vector<64x128xf32>
    %87 = arith.addf %85, %86 : vector<64x128xf32>
    %88 = arith.subf %78, %87 : vector<64x128xf32>
    %89 = vector.broadcast %23 : vector<1x128xf32> to vector<64x128xf32>
    %90 = arith.mulf %89, %88 : vector<64x128xf32>
    %91 = arith.addf %90, %25 : vector<64x128xf32>
    %c5_i32 = arith.constant 5 : i32
    %92 = arith.truncf %91 : vector<64x128xf32> to vector<64x128xbf16>
    %93 = arith.extf %92 : vector<64x128xbf16> to vector<64x128xf32>
    %94 = arith.subf %91, %93 : vector<64x128xf32>
    %95 = arith.truncf %94 : vector<64x128xf32> to vector<64x128xbf16>
    %96 = tpu.concatenate %92, %95 in 1 : vector<64x128xbf16>, vector<64x128xbf16> -> vector<64x256xbf16>
    %cst_26 = arith.constant dense<0.000000e+00> : vector<64x256xf32>
    %97 = tpu.matmul %26, %96, %cst_26 {dimension_numbers = #tpu.dot_dimension_numbers<[1], [0], [0], [1], [0, 0, 1, 1], [], []>} : vector<64x64xbf16>, vector<64x256xbf16>, vector<64x256xf32> -> vector<64x256xf32>
    %98 = vector.extract_strided_slice %97 {offsets = [0, 0], sizes = [64, 128], strides = [1, 1]} : vector<64x256xf32> to vector<64x128xf32>
    %99 = vector.extract_strided_slice %97 {offsets = [0, 128], sizes = [64, 128], strides = [1, 1]} : vector<64x256xf32> to vector<64x128xf32>
    %100 = arith.addf %98, %99 : vector<64x128xf32>
    %101 = arith.subf %91, %100 : vector<64x128xf32>
    %102 = vector.broadcast %23 : vector<1x128xf32> to vector<64x128xf32>
    %103 = arith.mulf %102, %101 : vector<64x128xf32>
    %104 = arith.addf %103, %25 : vector<64x128xf32>
    %c6_i32 = arith.constant 6 : i32
    %105 = arith.truncf %104 : vector<64x128xf32> to vector<64x128xbf16>
    %106 = arith.extf %105 : vector<64x128xbf16> to vector<64x128xf32>
    %107 = arith.subf %104, %106 : vector<64x128xf32>
    %108 = arith.truncf %107 : vector<64x128xf32> to vector<64x128xbf16>
    %109 = tpu.concatenate %105, %108 in 1 : vector<64x128xbf16>, vector<64x128xbf16> -> vector<64x256xbf16>
    %cst_27 = arith.constant dense<0.000000e+00> : vector<64x256xf32>
    %110 = tpu.matmul %26, %109, %cst_27 {dimension_numbers = #tpu.dot_dimension_numbers<[1], [0], [0], [1], [0, 0, 1, 1], [], []>} : vector<64x64xbf16>, vector<64x256xbf16>, vector<64x256xf32> -> vector<64x256xf32>
    %111 = vector.extract_strided_slice %110 {offsets = [0, 0], sizes = [64, 128], strides = [1, 1]} : vector<64x256xf32> to vector<64x128xf32>
    %112 = vector.extract_strided_slice %110 {offsets = [0, 128], sizes = [64, 128], strides = [1, 1]} : vector<64x256xf32> to vector<64x128xf32>
    %113 = arith.addf %111, %112 : vector<64x128xf32>
    %114 = arith.subf %104, %113 : vector<64x128xf32>
    %115 = vector.broadcast %23 : vector<1x128xf32> to vector<64x128xf32>
    %116 = arith.mulf %115, %114 : vector<64x128xf32>
    %117 = arith.addf %116, %25 : vector<64x128xf32>
    %c7_i32 = arith.constant 7 : i32
    %118 = arith.truncf %117 : vector<64x128xf32> to vector<64x128xbf16>
    %119 = arith.extf %118 : vector<64x128xbf16> to vector<64x128xf32>
    %120 = arith.subf %117, %119 : vector<64x128xf32>
    %121 = arith.truncf %120 : vector<64x128xf32> to vector<64x128xbf16>
    %122 = tpu.concatenate %118, %121 in 1 : vector<64x128xbf16>, vector<64x128xbf16> -> vector<64x256xbf16>
    %cst_28 = arith.constant dense<0.000000e+00> : vector<64x256xf32>
    %123 = tpu.matmul %26, %122, %cst_28 {dimension_numbers = #tpu.dot_dimension_numbers<[1], [0], [0], [1], [0, 0, 1, 1], [], []>} : vector<64x64xbf16>, vector<64x256xbf16>, vector<64x256xf32> -> vector<64x256xf32>
    %124 = vector.extract_strided_slice %123 {offsets = [0, 0], sizes = [64, 128], strides = [1, 1]} : vector<64x256xf32> to vector<64x128xf32>
    %125 = vector.extract_strided_slice %123 {offsets = [0, 128], sizes = [64, 128], strides = [1, 1]} : vector<64x256xf32> to vector<64x128xf32>
    %126 = arith.addf %124, %125 : vector<64x128xf32>
    %127 = arith.subf %117, %126 : vector<64x128xf32>
    %128 = vector.broadcast %23 : vector<1x128xf32> to vector<64x128xf32>
    %129 = arith.mulf %128, %127 : vector<64x128xf32>
    %130 = arith.addf %129, %25 : vector<64x128xf32>
    %c8_i32 = arith.constant 8 : i32
    %131 = arith.truncf %130 : vector<64x128xf32> to vector<64x128xbf16>
    %132 = arith.extf %131 : vector<64x128xbf16> to vector<64x128xf32>
    %133 = arith.subf %130, %132 : vector<64x128xf32>
    %134 = arith.truncf %133 : vector<64x128xf32> to vector<64x128xbf16>
    %135 = tpu.concatenate %131, %134 in 1 : vector<64x128xbf16>, vector<64x128xbf16> -> vector<64x256xbf16>
    %cst_29 = arith.constant dense<0.000000e+00> : vector<64x256xf32>
    %136 = tpu.matmul %26, %135, %cst_29 {dimension_numbers = #tpu.dot_dimension_numbers<[1], [0], [0], [1], [0, 0, 1, 1], [], []>} : vector<64x64xbf16>, vector<64x256xbf16>, vector<64x256xf32> -> vector<64x256xf32>
    %137 = vector.extract_strided_slice %136 {offsets = [0, 0], sizes = [64, 128], strides = [1, 1]} : vector<64x256xf32> to vector<64x128xf32>
    %138 = vector.extract_strided_slice %136 {offsets = [0, 128], sizes = [64, 128], strides = [1, 1]} : vector<64x256xf32> to vector<64x128xf32>
    %139 = arith.addf %137, %138 : vector<64x128xf32>
    %140 = arith.subf %130, %139 : vector<64x128xf32>
    %141 = vector.broadcast %23 : vector<1x128xf32> to vector<64x128xf32>
    %142 = arith.mulf %141, %140 : vector<64x128xf32>
    %143 = arith.addf %142, %25 : vector<64x128xf32>
    %c9_i32 = arith.constant 9 : i32
    %144 = arith.truncf %143 : vector<64x128xf32> to vector<64x128xbf16>
    %145 = arith.extf %144 : vector<64x128xbf16> to vector<64x128xf32>
    %146 = arith.subf %143, %145 : vector<64x128xf32>
    %147 = arith.truncf %146 : vector<64x128xf32> to vector<64x128xbf16>
    %148 = tpu.concatenate %144, %147 in 1 : vector<64x128xbf16>, vector<64x128xbf16> -> vector<64x256xbf16>
    %cst_30 = arith.constant dense<0.000000e+00> : vector<64x256xf32>
    %149 = tpu.matmul %26, %148, %cst_30 {dimension_numbers = #tpu.dot_dimension_numbers<[1], [0], [0], [1], [0, 0, 1, 1], [], []>} : vector<64x64xbf16>, vector<64x256xbf16>, vector<64x256xf32> -> vector<64x256xf32>
    %150 = vector.extract_strided_slice %149 {offsets = [0, 0], sizes = [64, 128], strides = [1, 1]} : vector<64x256xf32> to vector<64x128xf32>
    %151 = vector.extract_strided_slice %149 {offsets = [0, 128], sizes = [64, 128], strides = [1, 1]} : vector<64x256xf32> to vector<64x128xf32>
    %152 = arith.addf %150, %151 : vector<64x128xf32>
    %153 = arith.subf %143, %152 : vector<64x128xf32>
    %154 = vector.broadcast %23 : vector<1x128xf32> to vector<64x128xf32>
    %155 = arith.mulf %154, %153 : vector<64x128xf32>
    %156 = arith.addf %155, %25 : vector<64x128xf32>
    %cst_31 = arith.constant 0.000000e+00 : f32
    %157 = vector.broadcast %cst_31 : f32 to vector<64x128xf32>
    %158 = arith.maximumf %156, %157 : vector<64x128xf32>
    %159 = arith.mulf %158, %11 : vector<64x128xf32>
    %cst_32 = arith.constant dense<0.000000e+00> : vector<128xf32>
    %160 = vector.multi_reduction <add>, %159, %cst_32 [0] : vector<64x128xf32> to vector<128xf32>
    %161 = vector.shape_cast %160 : vector<128xf32> to vector<1x128xf32>
    %162 = vector.extract_strided_slice %161 {offsets = [0, 0], sizes = [1, 32], strides = [1, 1]} : vector<1x128xf32> to vector<1x32xf32>
    %cst_33 = arith.constant dense<0.000000e+00> : vector<1xf32>
    %163 = vector.multi_reduction <add>, %162, %cst_33 [1] : vector<1x32xf32> to vector<1xf32>
    %164 = vector.shape_cast %163 : vector<1xf32> to vector<1x1xf32>
    %165 = arith.addf %164, %18 : vector<1x1xf32>
    %166 = vector.extract_strided_slice %161 {offsets = [0, 32], sizes = [1, 32], strides = [1, 1]} : vector<1x128xf32> to vector<1x32xf32>
    %cst_34 = arith.constant dense<0.000000e+00> : vector<1xf32>
    %167 = vector.multi_reduction <add>, %166, %cst_34 [1] : vector<1x32xf32> to vector<1xf32>
    %168 = vector.shape_cast %167 : vector<1xf32> to vector<1x1xf32>
    %169 = arith.addf %168, %18 : vector<1x1xf32>
    %170 = vector.extract_strided_slice %161 {offsets = [0, 64], sizes = [1, 32], strides = [1, 1]} : vector<1x128xf32> to vector<1x32xf32>
    %cst_35 = arith.constant dense<0.000000e+00> : vector<1xf32>
    %171 = vector.multi_reduction <add>, %170, %cst_35 [1] : vector<1x32xf32> to vector<1xf32>
    %172 = vector.shape_cast %171 : vector<1xf32> to vector<1x1xf32>
    %173 = arith.addf %172, %18 : vector<1x1xf32>
    %174 = arith.maximumf %165, %169 : vector<1x1xf32>
    %175 = arith.maximumf %174, %173 : vector<1x1xf32>
    %176 = arith.subf %165, %175 : vector<1x1xf32>
    %177 = math.exp %176 : vector<1x1xf32>
    %178 = arith.subf %169, %175 : vector<1x1xf32>
    %179 = math.exp %178 : vector<1x1xf32>
    %180 = arith.subf %173, %175 : vector<1x1xf32>
    %181 = math.exp %180 : vector<1x1xf32>
    %182 = arith.addf %177, %179 : vector<1x1xf32>
    %183 = arith.addf %182, %181 : vector<1x1xf32>
    %cst_36 = arith.constant 1.000000e+00 : f32
    %184 = vector.broadcast %cst_36 : f32 to vector<1x1xf32>
    %185 = arith.divf %184, %183 : vector<1x1xf32>
    %186 = tpu.iota {dimensions = array<i32: 1>} : vector<1x128xi32>
    %cst_37 = arith.constant 0.000000e+00 : f32
    %187 = vector.broadcast %cst_37 : f32 to vector<1x128xf32>
    %c0_i32_38 = arith.constant 0 : i32
    %188 = vector.broadcast %c0_i32_38 : i32 to vector<1x128xi32>
    %189 = arith.cmpi sge, %186, %188 : vector<1x128xi32>
    %c32_i32 = arith.constant 32 : i32
    %190 = vector.broadcast %c32_i32 : i32 to vector<1x128xi32>
    %191 = arith.cmpi slt, %186, %190 : vector<1x128xi32>
    %192 = arith.andi %189, %191 : vector<1x128xi1>
    %193 = arith.mulf %177, %185 : vector<1x1xf32>
    %cst_39 = arith.constant 0.000000e+00 : f32
    %194 = vector.shape_cast %193 : vector<1x1xf32> to vector<1x1xf32>
    %195 = vector.broadcast %194 : vector<1x1xf32> to vector<1x128xf32>
    %196 = vector.broadcast %cst_39 : f32 to vector<1x128xf32>
    %197 = arith.select %192, %195, %196 : vector<1x128xi1>, vector<1x128xf32>
    %198 = arith.addf %187, %197 : vector<1x128xf32>
    %c32_i32_40 = arith.constant 32 : i32
    %199 = vector.broadcast %c32_i32_40 : i32 to vector<1x128xi32>
    %200 = arith.cmpi sge, %186, %199 : vector<1x128xi32>
    %c64_i32 = arith.constant 64 : i32
    %201 = vector.broadcast %c64_i32 : i32 to vector<1x128xi32>
    %202 = arith.cmpi slt, %186, %201 : vector<1x128xi32>
    %203 = arith.andi %200, %202 : vector<1x128xi1>
    %204 = arith.mulf %179, %185 : vector<1x1xf32>
    %cst_41 = arith.constant 0.000000e+00 : f32
    %205 = vector.shape_cast %204 : vector<1x1xf32> to vector<1x1xf32>
    %206 = vector.broadcast %205 : vector<1x1xf32> to vector<1x128xf32>
    %207 = vector.broadcast %cst_41 : f32 to vector<1x128xf32>
    %208 = arith.select %203, %206, %207 : vector<1x128xi1>, vector<1x128xf32>
    %209 = arith.addf %198, %208 : vector<1x128xf32>
    %c64_i32_42 = arith.constant 64 : i32
    %210 = vector.broadcast %c64_i32_42 : i32 to vector<1x128xi32>
    %211 = arith.cmpi sge, %186, %210 : vector<1x128xi32>
    %c96_i32 = arith.constant 96 : i32
    %212 = vector.broadcast %c96_i32 : i32 to vector<1x128xi32>
    %213 = arith.cmpi slt, %186, %212 : vector<1x128xi32>
    %214 = arith.andi %211, %213 : vector<1x128xi1>
    %215 = arith.mulf %181, %185 : vector<1x1xf32>
    %cst_43 = arith.constant 0.000000e+00 : f32
    %216 = vector.shape_cast %215 : vector<1x1xf32> to vector<1x1xf32>
    %217 = vector.broadcast %216 : vector<1x1xf32> to vector<1x128xf32>
    %218 = vector.broadcast %cst_43 : f32 to vector<1x128xf32>
    %219 = arith.select %214, %217, %218 : vector<1x128xi1>, vector<1x128xf32>
    %220 = arith.addf %209, %219 : vector<1x128xf32>
    %221 = vector.broadcast %220 : vector<1x128xf32> to vector<64x128xf32>
    %222 = arith.mulf %158, %221 : vector<64x128xf32>
    %c0_44 = arith.constant 0 : index
    %c0_45 = arith.constant 0 : index
    %223 = vector.load %arg9[%c0_44, %c0_45] : memref<64x128xf32, #tpu.memory_space<vmem>>, vector<64x128xf32>
    tpu.vector_store %arg9[%c0_44, %c0_45], %222 {strides = array<i32>} : memref<64x128xf32, #tpu.memory_space<vmem>>, vector<64x128xf32>,
    return
  }
}

</mosaic_0001>

<llo_original>
// kernel: tpu_custom_call.1
$region0: #{tpu_custom_call.1}
  #allocation0 [shape = 'u32[]', space=smem, size = 0x4, offset = 0x4, fixed_abs, tag = 'smem constant byte address 0x4 - core index']
  #allocation1 [shape = 'u32[144,128]{1,0:T(1,128)}', space=vmem, size = 0x12000, scoped, tag = 'internal scratch']
  #allocation2 [shape = 'bf16[64,64]{1,0:T(8,128)(2,1)}', space=vmem, size = 0x4000, scoped, tag = 'scratch operand']
  #allocation3 [shape = 's32[1]{0}', space=sflag, size = 0x4, scoped, tag = 'scratch operand']
  #allocation8 [shape = 's32[]', space=sflag, size = 0x4, offset = 0, fixed_abs, tag = 'sflag constant byte address 0x0 - dummy sync flag']
  %s0 = inlined_call_operand.vmem [shape: f32[64,8], index: 0, kind: input, shape index: {}]
  %s1 = inlined_call_operand.vmem [shape: bf16[64,64], index: 1, kind: input, shape index: {}]
  %s2 = inlined_call_operand.vmem [shape: f32[8,128], index: 2, kind: input, shape index: {}]
  %s3 = inlined_call_operand.vmem [shape: f32[1,128], index: 3, kind: input, shape index: {}]
  %s4 = inlined_call_operand.hbm [shape: f32[8,32], index: 4, kind: input, shape index: {}]
  %s5 = inlined_call_operand.vmem [shape: f32[1,32], index: 5, kind: input, shape index: {}]
  %s6 = inlined_call_operand.vmem [shape: f32[32,128], index: 6, kind: input, shape index: {}]
  %s7 = inlined_call_operand.vmem [shape: f32[1,32], index: 7, kind: input, shape index: {}]
  %s8 = inlined_call_operand.vmem [shape: f32[1,128], index: 8, kind: input, shape index: {}]
  %s9 = inlined_call_operand.hbm [shape: f32[64,128], index: 9, kind: output, shape index: {}]
  %s10 = sld [smem:[#allocation0]]
  $region80: #{tpu_custom_call.1} parent=0
    _
  %s12 = ssub.s32 1, %s10
  %s13 = scalar_select 0, %s12, %s10
  $region1: #{tpu_custom_call.1} parent=0
    #allocation4 [shape = 'u8[4096]{0}', space=vmem, size = 0x1000, scoped, tag = 'input window, operand 4, single buffered']
    #allocation5 [shape = 's32[1]{0}', space=sflag, size = 0x4, scoped, tag = 'scoped memory for tpu_custom_call.1']
    #allocation6 [shape = 's32[1]{0}', space=sflag, size = 0x4, scoped, tag = 'scoped memory for tpu_custom_call.1']
    #allocation7 [shape = 'u8[32768]{0}', space=vmem, size = 0x8000, scoped, tag = 'output window, operand 0, single buffered']
    %14 = vsyncpa [#allocation5], 0
    %15 = vsyncpa [#allocation6], 0
    // Predicated region
    $region2: #{tpu_custom_call.1} parent=1 // pred_check
      _
    $region3: #{tpu_custom_call.1} parent=1 // pred_check_branch
      %17 = sbr.rel (0) target = $region5
    $region4: #{tpu_custom_call.1} parent=1 // pred_region
      _
    $region5: #{tpu_custom_call.1} parent=1 // pred_fallthru
      _
    // Predicated region
    $region6: #{tpu_custom_call.1} parent=1 // pred_check
      _
    $region7: #{tpu_custom_call.1} parent=1 // pred_check_branch
      %19 = sbr.rel (0) target = $region9
    $region8: #{tpu_custom_call.1} parent=1 // pred_region
      _
    $region9: #{tpu_custom_call.1} parent=1 // pred_fallthru
      _
    // Predicated region
    $region10: #{tpu_custom_call.1} parent=1 // pred_check
      _
    $region11: #{tpu_custom_call.1} parent=1 // pred_check_branch
      %21 = sbr.rel (0) target = $region13
    $region12: #{tpu_custom_call.1} parent=1 // pred_region
      _
    $region13: #{tpu_custom_call.1} parent=1 // pred_fallthru
      _
    // Predicated region
    $region14: #{tpu_custom_call.1} parent=1 // pred_check
      _
    $region15: #{tpu_custom_call.1} parent=1 // pred_check_branch
      %23 = sbr.rel (0) target = $region17
    $region16: #{tpu_custom_call.1} parent=1 // pred_region
      %s25 = ssub.s32 128, 128
      %26 = vsyncadd [#allocation5], %s25
      %s28 = sshll.u32 [#allocation4], 4
      %s29 = int_to_ptr.vmem [resolvable:$true] %s28
      %31 = dma.hbm_to_vmem [thread:$0]  %s4, 128, %s29, [#allocation5]
    $region17: #{tpu_custom_call.1} parent=1 // pred_fallthru
      _
    // Predicated region
    $region18: #{tpu_custom_call.1} parent=1 // pred_check
      _
    $region19: #{tpu_custom_call.1} parent=1 // pred_check_branch
      %33 = sbr.rel (0) target = $region21
    $region20: #{tpu_custom_call.1} parent=1 // pred_region
      _
    $region21: #{tpu_custom_call.1} parent=1 // pred_fallthru
      _
    // Predicated region
    $region22: #{tpu_custom_call.1} parent=1 // pred_check
      _
    $region23: #{tpu_custom_call.1} parent=1 // pred_check_branch
      %35 = sbr.rel (0) target = $region25
    $region24: #{tpu_custom_call.1} parent=1 // pred_region
      _
    $region25: #{tpu_custom_call.1} parent=1 // pred_fallthru
      _
    // Predicated region
    $region26: #{tpu_custom_call.1} parent=1 // pred_check
      _
    $region27: #{tpu_custom_call.1} parent=1 // pred_check_branch
      %37 = sbr.rel (0) target = $region29
    $region28: #{tpu_custom_call.1} parent=1 // pred_region
      _
    $region29: #{tpu_custom_call.1} parent=1 // pred_fallthru
      _
    // Predicated region
    $region30: #{tpu_custom_call.1} parent=1 // pred_check
      _
    $region31: #{tpu_custom_call.1} parent=1 // pred_check_branch
      %39 = sbr.rel (0) target = $region33
    $region32: #{tpu_custom_call.1} parent=1 // pred_region
      _
    $region33: #{tpu_custom_call.1} parent=1 // pred_fallthru
      _
    // Predicated region
    $region34: #{tpu_custom_call.1} parent=1 // pred_check
      _
    $region35: #{tpu_custom_call.1} parent=1 // pred_check_branch
      %41 = sbr.rel (0) target = $region37
    $region36: #{tpu_custom_call.1} parent=1 // pred_region
      %42 = dma.done [#allocation5], 128
    $region37: #{tpu_custom_call.1} parent=1 // pred_fallthru
      _
    %p45 = scmp.lt.u32.totalorder 32, 8
    %p46 = pneg %p45
    // Predicated region
    $region38: #{tpu_custom_call.1} parent=1 // pred_check
      _
    $region39: #{tpu_custom_call.1} parent=1 // pred_check_branch
      %48 = sbr.rel (%p45) target = $region41
    $region40: #{tpu_custom_call.1} parent=1 // pred_region
      %s64 = sand.u32 32, 7
      %p65 = scmp.eq.s32.totalorder %s64, 0
      // Predicated region
      $region53: #{tpu_custom_call.1} parent=40 // pred_check
        %p66 = pneg %p65
      $region54: #{tpu_custom_call.1} parent=40 // pred_check_branch
        %68 = sbr.rel (%p66) target = $region56
      $region55: #{tpu_custom_call.1} parent=40 // pred_region
        loop: start=0, step=1, limit=1
        $region57: #{tpu_custom_call.1} parent=55 // loop_pre_header
          _
        $region58: #{tpu_custom_call.1} parent=55 // loop_header
          %s70 = sphi 0, %s74
          %p71 = scmp.ge.s32.totalorder %s70, 1
          %s75 = sphi %s1, %s1
          %s76 = sphi [#allocation2], [#allocation2]
        $region59: #{tpu_custom_call.1} parent=55 // loop_header_branch
          %73 = sbr.rel (%p71) target = $region63
        $region60: #{tpu_custom_call.1} parent=55 // loop_body
          %v77 = vld [vmem:[%s75] sm:$0xff]
          %78 = vst [vmem:[%s76] sm:$0xff] %v77
          %v79 = vld [vmem:[%s75 + $0x8] sm:$0xff]
          %80 = vst [vmem:[%s76 + $0x8] sm:$0xff] %v79
          %v81 = vld [vmem:[%s75 + $0x10] sm:$0xff]
          %82 = vst [vmem:[%s76 + $0x10] sm:$0xff] %v81
          %v83 = vld [vmem:[%s75 + $0x18] sm:$0xff]
          %84 = vst [vmem:[%s76 + $0x18] sm:$0xff] %v83
        $region61: #{tpu_custom_call.1} parent=55 // loop_footer
          %s74 = sadd.s32 1, %s70
        $region62: #{tpu_custom_call.1} parent=55 // loop_footer_branch
          %69 = sbr.rel target = $region58
        $region63: #{tpu_custom_call.1} parent=55 // loop_exit
          _
      $region56: #{tpu_custom_call.1} parent=40 // pred_fallthru
        _
      %p85 = pneg %p65
      // Predicated region
      $region64: #{tpu_custom_call.1} parent=40 // pred_check
        _
      $region65: #{tpu_custom_call.1} parent=40 // pred_check_branch
        %87 = sbr.rel (%p65) target = $region67
      $region66: #{tpu_custom_call.1} parent=40 // pred_region
        %s88 = sand.u32 32, 7
      $region67: #{tpu_custom_call.1} parent=40 // pred_fallthru
        _
    $region41: #{tpu_custom_call.1} parent=1 // pred_fallthru
      _
    // Predicated region
    $region42: #{tpu_custom_call.1} parent=1 // pred_check
      %p49 = pneg %p45
    $region43: #{tpu_custom_call.1} parent=1 // pred_check_branch
      %51 = sbr.rel (%p49) target = $region45
    $region44: #{tpu_custom_call.1} parent=1 // pred_region
      %s52 = sshll.u32 1, 32
      %s53 = ssub.s32 %s52, 1
      loop: start=0, step=1, limit=1
      $region46: #{tpu_custom_call.1} parent=44 // loop_pre_header
        _
      $region47: #{tpu_custom_call.1} parent=44 // loop_header
        %s55 = sphi 0, %s59
        %p56 = scmp.ge.s32.totalorder %s55, 1
        %s60 = sphi %s1, %s1
        %s61 = sphi [#allocation2], [#allocation2]
      $region48: #{tpu_custom_call.1} parent=44 // loop_header_branch
        %58 = sbr.rel (%p56) target = $region52
      $region49: #{tpu_custom_call.1} parent=44 // loop_body
        %v62 = vld [vmem:[%s60] sm:%s53]
        %63 = vst [vmem:[%s61] sm:%s53] %v62
      $region50: #{tpu_custom_call.1} parent=44 // loop_footer
        %s59 = sadd.s32 1, %s55
      $region51: #{tpu_custom_call.1} parent=44 // loop_footer_branch
        %54 = sbr.rel target = $region47
      $region52: #{tpu_custom_call.1} parent=44 // loop_exit
        _
    $region45: #{tpu_custom_call.1} parent=1 // pred_fallthru
      _
    // Predicated region
    $region68: #{tpu_custom_call.1} parent=1 // pred_check
      _
    $region69: #{tpu_custom_call.1} parent=1 // pred_check_branch
      %91 = sbr.rel (0) target = $region71
    $region70: #{tpu_custom_call.1} parent=1 // pred_region
      %92 = vsyncadd [#allocation3], 512
    $region71: #{tpu_custom_call.1} parent=1 // pred_fallthru
      _
    %v93 = vld [vmem:[%s0] sm:$0xff]
    %v94 = vld [vmem:[%s0 + $0x8] sm:$0xff]
    %v95 = vld [vmem:[%s0 + $0x10] sm:$0xff]
    %v96 = vld [vmem:[%s0 + $0x18] sm:$0xff]
    %v97 = vld [vmem:[%s0 + $0x20] sm:$0xff]
    %v98 = vld [vmem:[%s0 + $0x28] sm:$0xff]
    %v99 = vld [vmem:[%s0 + $0x30] sm:$0xff]
    %v100 = vld [vmem:[%s0 + $0x38] sm:$0xff]
    %v101 = vld [vmem:[%s2] sm:$0xff]
    %v102 = vld [vmem:[%s3] sm:$0x1]
    %v103 = vld [vmem:[#allocation4] sm:$0xff]
    %v104 = vld [vmem:[%s5] sm:$0x1]
    %v105 = vld [vmem:[%s6] sm:$0xff]
    %v106 = vld [vmem:[%s6 + $0x8] sm:$0xff]
    %v107 = vld [vmem:[%s6 + $0x10] sm:$0xff]
    %v108 = vld [vmem:[%s6 + $0x18] sm:$0xff]
    %v109 = vld [vmem:[%s7] sm:$0x1]
    %v110 = vld [vmem:[%s8] sm:$0x1]
    %v112 = vlaneseq
    %v113 = vshrl.u32 %v112, 7
    %v114 = vsub.s32 0, %v113
    %v115 = vrot.slane %v104, %v114
    %vm117 = vcmask 64512
    %v119 = vsel %vm117, %v93, 0
    %v122 = vsel %vm117, %v94, 0
    %v125 = vsel %vm117, %v95, 0
    %v128 = vsel %vm117, %v96, 0
    %v131 = vsel %vm117, %v97, 0
    %v134 = vsel %vm117, %v98, 0
    %v137 = vsel %vm117, %v99, 0
    %v140 = vsel %vm117, %v100, 0
    %142 = vmatprep.subr.mxu0 0.0
    %143 = vmatpush1.msra.mxu0 0.0
    %144 = vmatprep.subr.mxu0 0.0
    %145 = vmatpush1.msra.mxu0 0.0
    %146 = vmatprep.subr.mxu0 0.0
    %147 = vmatpush1.msra.mxu0 0.0
    %148 = vmatprep.subr.mxu0 0.0
    %149 = vmatpush1.msra.mxu0 0.0
    %150 = vmatprep.subr.mxu0 0.0
    %151 = vmatpush1.msra.mxu0 0.0
    %152 = vmatprep.subr.mxu0 0.0
    %153 = vmatpush1.msra.mxu0 0.0
    %154 = vmatprep.subr.mxu0 0.0
    %155 = vmatpush1.msra.mxu0 0.0
    %156 = vmatprep.subr.mxu0 0.0
    %157 = vmatpush1.msra.mxu0 0.0
    %158 = vmatprep.subr.mxu0 0.0
    %159 = vmatpush1.msra.mxu0 0.0
    %160 = vmatprep.subr.mxu0 0.0
    %161 = vmatpush1.msra.mxu0 0.0
    %162 = vmatprep.subr.mxu0 0.0
    %163 = vmatpush1.msra.mxu0 0.0
    %164 = vmatprep.subr.mxu0 0.0
    %165 = vmatpush1.msra.mxu0 0.0
    %166 = vmatprep.subr.mxu0 0.0
    %167 = vmatpush1.msra.mxu0 0.0
    %168 = vmatprep.subr.mxu0 0.0
    %169 = vmatpush1.msra.mxu0 0.0
    %170 = vmatprep.subr.mxu0 0.0
    %171 = vmatpush1.msra.mxu0 0.0
    %172 = vmatprep.subr.mxu0 0.0
    %173 = vmatpush1.msra.mxu0 %v103
    %174 = vmatprep.subr.mxu0 0.0
    %175 = vmatpush2.msra.mxu0 0.0
    %176 = vmatprep.subr.mxu0 0.0
    %177 = vmatpush2.msra.mxu0 0.0
    %178 = vmatprep.subr.mxu0 0.0
    %179 = vmatpush2.msra.mxu0 0.0
    %180 = vmatprep.subr.mxu0 0.0
    %181 = vmatpush2.msra.mxu0 0.0
    %182 = vmatprep.subr.mxu0 0.0
    %183 = vmatpush2.msra.mxu0 0.0
    %184 = vmatprep.subr.mxu0 0.0
    %185 = vmatpush2.msra.mxu0 0.0
    %186 = vmatprep.subr.mxu0 0.0
    %187 = vmatpush2.msra.mxu0 0.0
    %188 = vmatprep.subr.mxu0 0.0
    %189 = vmatpush2.msra.mxu0 0.0
    %190 = vmatprep.subr.mxu0 0.0
    %191 = vmatpush2.msra.mxu0 0.0
    %192 = vmatprep.subr.mxu0 0.0
    %193 = vmatpush2.msra.mxu0 0.0
    %194 = vmatprep.subr.mxu0 0.0
    %195 = vmatpush2.msra.mxu0 0.0
    %196 = vmatprep.subr.mxu0 0.0
    %197 = vmatpush2.msra.mxu0 0.0
    %198 = vmatprep.subr.mxu0 0.0
    %199 = vmatpush2.msra.mxu0 0.0
    %200 = vmatprep.subr.mxu0 0.0
    %201 = vmatpush2.msra.mxu0 0.0
    %202 = vmatprep.subr.mxu0 0.0
    %203 = vmatpush2.msra.mxu0 0.0
    %204 = vmatprep.subr.mxu0 0.0
    %205 = vmatpush2.msra.mxu0 0.0
    %206 = vmatprep.mubr.f32.mxu0 0.0
    %207 = vmatmul.mubr.f32.gmra.mxu0 %v119
    %v208 = vpop.f32.mrf.mxu0
    %v209 = vadd.f32 %v115, %v208
    %v210 = vpop.f32.mrf.mxu0
    %211 = vmatprep.mubr.f32.mxu0 0.0
    %212 = vmatmul.mubr.f32.gmra.mxu0 %v122
    %v213 = vpop.f32.mrf.mxu0
    %v214 = vadd.f32 %v115, %v213
    %v215 = vpop.f32.mrf.mxu0
    %216 = vmatprep.mubr.f32.mxu0 0.0
    %217 = vmatmul.mubr.f32.gmra.mxu0 %v125
    %v218 = vpop.f32.mrf.mxu0
    %v219 = vadd.f32 %v115, %v218
    %v220 = vpop.f32.mrf.mxu0
    %221 = vmatprep.mubr.f32.mxu0 0.0
    %222 = vmatmul.mubr.f32.gmra.mxu0 %v128
    %v223 = vpop.f32.mrf.mxu0
    %v224 = vadd.f32 %v115, %v223
    %v225 = vpop.f32.mrf.mxu0
    %226 = vmatprep.mubr.f32.mxu0 0.0
    %227 = vmatmul.mubr.f32.gmra.mxu0 %v131
    %v228 = vpop.f32.mrf.mxu0
    %v229 = vadd.f32 %v115, %v228
    %v230 = vpop.f32.mrf.mxu0
    %231 = vmatprep.mubr.f32.mxu0 0.0
    %232 = vmatmul.mubr.f32.gmra.mxu0 %v134
    %v233 = vpop.f32.mrf.mxu0
    %v234 = vadd.f32 %v115, %v233
    %v235 = vpop.f32.mrf.mxu0
    %236 = vmatprep.mubr.f32.mxu0 0.0
    %237 = vmatmul.mubr.f32.gmra.mxu0 %v137
    %v238 = vpop.f32.mrf.mxu0
    %v239 = vadd.f32 %v115, %v238
    %v240 = vpop.f32.mrf.mxu0
    %241 = vmatprep.mubr.f32.mxu0 0.0
    %242 = vmatmul.mubr.f32.gmra.mxu0 %v140
    %v243 = vpop.f32.mrf.mxu0
    %v244 = vadd.f32 %v115, %v243
    %v245 = vpop.f32.mrf.mxu0
    %246 = vdwg.mxu0
    %vm247 = vcmask 261120
    %v249 = vsel %vm247, %v209, 0
    %v252 = vsel %vm247, %v214, 0
    %v255 = vsel %vm247, %v219, 0
    %v258 = vsel %vm247, %v224, 0
    %v261 = vsel %vm247, %v229, 0
    %v264 = vsel %vm247, %v234, 0
    %v267 = vsel %vm247, %v239, 0
    %v270 = vsel %vm247, %v244, 0
    %272 = vmatprep.subr.mxu0 0.0
    %273 = vmatpush1.msra.mxu0 0.0
    %274 = vmatprep.subr.mxu0 0.0
    %275 = vmatpush1.msra.mxu0 0.0
    %276 = vmatprep.subr.mxu0 0.0
    %277 = vmatpush1.msra.mxu0 0.0
    %278 = vmatprep.subr.mxu0 0.0
    %279 = vmatpush1.msra.mxu0 0.0
    %280 = vmatprep.subr.mxu0 0.0
    %281 = vmatpush1.msra.mxu0 0.0
    %282 = vmatprep.subr.mxu0 0.0
    %283 = vmatpush1.msra.mxu0 0.0
    %284 = vmatprep.subr.mxu0 0.0
    %285 = vmatpush1.msra.mxu0 0.0
    %286 = vmatprep.subr.mxu0 0.0
    %287 = vmatpush1.msra.mxu0 0.0
    %288 = vmatprep.subr.mxu0 0.0
    %289 = vmatpush1.msra.mxu0 0.0
    %290 = vmatprep.subr.mxu0 0.0
    %291 = vmatpush1.msra.mxu0 0.0
    %292 = vmatprep.subr.mxu0 0.0
    %293 = vmatpush1.msra.mxu0 0.0
    %294 = vmatprep.subr.mxu0 0.0
    %295 = vmatpush1.msra.mxu0 0.0
    %296 = vmatprep.subr.mxu0 0.0
    %297 = vmatpush1.msra.mxu0 %v108
    %298 = vmatprep.subr.mxu0 0.0
    %299 = vmatpush1.msra.mxu0 %v107
    %300 = vmatprep.subr.mxu0 0.0
    %301 = vmatpush1.msra.mxu0 %v106
    %302 = vmatprep.subr.mxu0 0.0
    %303 = vmatpush1.msra.mxu0 %v105
    %304 = vmatprep.subr.mxu0 0.0
    %305 = vmatpush2.msra.mxu0 0.0
    %306 = vmatprep.subr.mxu0 0.0
    %307 = vmatpush2.msra.mxu0 0.0
    %308 = vmatprep.subr.mxu0 0.0
    %309 = vmatpush2.msra.mxu0 0.0
    %310 = vmatprep.subr.mxu0 0.0
    %311 = vmatpush2.msra.mxu0 0.0
    %312 = vmatprep.subr.mxu0 0.0
    %313 = vmatpush2.msra.mxu0 0.0
    %314 = vmatprep.subr.mxu0 0.0
    %315 = vmatpush2.msra.mxu0 0.0
    %316 = vmatprep.subr.mxu0 0.0
    %317 = vmatpush2.msra.mxu0 0.0
    %318 = vmatprep.subr.mxu0 0.0
    %319 = vmatpush2.msra.mxu0 0.0
    %320 = vmatprep.subr.mxu0 0.0
    %321 = vmatpush2.msra.mxu0 0.0
    %322 = vmatprep.subr.mxu0 0.0
    %323 = vmatpush2.msra.mxu0 0.0
    %324 = vmatprep.subr.mxu0 0.0
    %325 = vmatpush2.msra.mxu0 0.0
    %326 = vmatprep.subr.mxu0 0.0
    %327 = vmatpush2.msra.mxu0 0.0
    %328 = vmatprep.subr.mxu0 0.0
    %329 = vmatpush2.msra.mxu0 0.0
    %330 = vmatprep.subr.mxu0 0.0
    %331 = vmatpush2.msra.mxu0 0.0
    %332 = vmatprep.subr.mxu0 0.0
    %333 = vmatpush2.msra.mxu0 0.0
    %334 = vmatprep.subr.mxu0 0.0
    %335 = vmatpush2.msra.mxu0 0.0
    %336 = vmatprep.mubr.f32.mxu0 0.0
    %337 = vmatmul.mubr.f32.gmra.mxu0 %v249
    %v338 = vpop.f32.mrf.mxu0
    %v339 = vadd.f32 0.0, %v338
    %v340 = vpop.f32.mrf.mxu0
    %341 = vmatprep.mubr.f32.mxu0 0.0
    %342 = vmatmul.mubr.f32.gmra.mxu0 %v252
    %v343 = vpop.f32.mrf.mxu0
    %v344 = vadd.f32 0.0, %v343
    %v345 = vpop.f32.mrf.mxu0
    %346 = vmatprep.mubr.f32.mxu0 0.0
    %347 = vmatmul.mubr.f32.gmra.mxu0 %v255
    %v348 = vpop.f32.mrf.mxu0
    %v349 = vadd.f32 0.0, %v348
    %v350 = vpop.f32.mrf.mxu0
    %351 = vmatprep.mubr.f32.mxu0 0.0
    %352 = vmatmul.mubr.f32.gmra.mxu0 %v258
    %v353 = vpop.f32.mrf.mxu0
    %v354 = vadd.f32 0.0, %v353
    %v355 = vpop.f32.mrf.mxu0
    %356 = vmatprep.mubr.f32.mxu0 0.0
    %357 = vmatmul.mubr.f32.gmra.mxu0 %v261
    %v358 = vpop.f32.mrf.mxu0
    %v359 = vadd.f32 0.0, %v358
    %v360 = vpop.f32.mrf.mxu0
    %361 = vmatprep.mubr.f32.mxu0 0.0
    %362 = vmatmul.mubr.f32.gmra.mxu0 %v264
    %v363 = vpop.f32.mrf.mxu0
    %v364 = vadd.f32 0.0, %v363
    %v365 = vpop.f32.mrf.mxu0
    %366 = vmatprep.mubr.f32.mxu0 0.0
    %367 = vmatmul.mubr.f32.gmra.mxu0 %v267
    %v368 = vpop.f32.mrf.mxu0
    %v369 = vadd.f32 0.0, %v368
    %v370 = vpop.f32.mrf.mxu0
    %371 = vmatprep.mubr.f32.mxu0 0.0
    %372 = vmatmul.mubr.f32.gmra.mxu0 %v270
    %v373 = vpop.f32.mrf.mxu0
    %v374 = vadd.f32 0.0, %v373
    %v375 = vpop.f32.mrf.mxu0
    %376 = vdwg.mxu0
    %v378 = vlaneseq
    %v379 = vshrl.u32 %v378, 7
    %v380 = vsub.s32 0, %v379
    %v381 = vrot.slane %v109, %v380
    %v383 = vmul.f32 %v209, %v381
    %v384 = vmul.f32 %v214, %v381
    %v385 = vmul.f32 %v219, %v381
    %v386 = vmul.f32 %v224, %v381
    %v387 = vmul.f32 %v229, %v381
    %v388 = vmul.f32 %v234, %v381
    %v389 = vmul.f32 %v239, %v381
    %v390 = vmul.f32 %v244, %v381
    %v391 = vsel %vm247, %v383, 0.0
    %v392 = vsel %vm247, %v384, 0.0
    %v393 = vadd.f32 %v391, %v392
    %v394 = vsel %vm247, %v385, 0.0
    %v395 = vadd.f32 %v393, %v394
    %v396 = vsel %vm247, %v386, 0.0
    %v397 = vadd.f32 %v395, %v396
    %v398 = vsel %vm247, %v387, 0.0
    %v399 = vadd.f32 %v397, %v398
    %v400 = vsel %vm247, %v388, 0.0
    %v401 = vadd.f32 %v399, %v400
    %v402 = vsel %vm247, %v389, 0.0
    %v403 = vadd.f32 %v401, %v402
    %v404 = vsel %vm247, %v390, 0.0
    %v405 = vadd.f32 %v403, %v404
    %406 = vadd.xlane.f32.xlu0 %v405
    %v407 = vpop.xlane.xlu0 %406
    %v408 = vrot.slane %v407, 4
    %v409 = vadd.f32 %v407, %v408
    %v410 = vrot.slane %v409, 2
    %v411 = vadd.f32 %v409, %v410
    %v412 = vrot.slane %v411, 1
    %v413 = vadd.f32 %v411, %v412
    %s414 = vtos %v413
    %v415 = vstv %s414
    %v417 = vlaneseq
    %v418 = vshrl.u32 %v417, 7
    %v419 = vsub.s32 0, %v418
    %v420 = vrot.slane %v102, %v419
    %422 = vmatprep.subr.mxu0 0.0
    %423 = vmatpush1.msra.mxu0 0.0
    %424 = vmatprep.subr.mxu0 0.0
    %425 = vmatpush1.msra.mxu0 0.0
    %426 = vmatprep.subr.mxu0 0.0
    %427 = vmatpush1.msra.mxu0 0.0
    %428 = vmatprep.subr.mxu0 0.0
    %429 = vmatpush1.msra.mxu0 0.0
    %430 = vmatprep.subr.mxu0 0.0
    %431 = vmatpush1.msra.mxu0 0.0
    %432 = vmatprep.subr.mxu0 0.0
    %433 = vmatpush1.msra.mxu0 0.0
    %434 = vmatprep.subr.mxu0 0.0
    %435 = vmatpush1.msra.mxu0 0.0
    %436 = vmatprep.subr.mxu0 0.0
    %437 = vmatpush1.msra.mxu0 0.0
    %438 = vmatprep.subr.mxu0 0.0
    %439 = vmatpush1.msra.mxu0 0.0
    %440 = vmatprep.subr.mxu0 0.0
    %441 = vmatpush1.msra.mxu0 0.0
    %442 = vmatprep.subr.mxu0 0.0
    %443 = vmatpush1.msra.mxu0 0.0
    %444 = vmatprep.subr.mxu0 0.0
    %445 = vmatpush1.msra.mxu0 0.0
    %446 = vmatprep.subr.mxu0 0.0
    %447 = vmatpush1.msra.mxu0 0.0
    %448 = vmatprep.subr.mxu0 0.0
    %449 = vmatpush1.msra.mxu0 0.0
    %450 = vmatprep.subr.mxu0 0.0
    %451 = vmatpush1.msra.mxu0 0.0
    %452 = vmatprep.subr.mxu0 0.0
    %453 = vmatpush1.msra.mxu0 %v101
    %454 = vmatprep.subr.mxu0 0.0
    %455 = vmatpush2.msra.mxu0 0.0
    %456 = vmatprep.subr.mxu0 0.0
    %457 = vmatpush2.msra.mxu0 0.0
    %458 = vmatprep.subr.mxu0 0.0
    %459 = vmatpush2.msra.mxu0 0.0
    %460 = vmatprep.subr.mxu0 0.0
    %461 = vmatpush2.msra.mxu0 0.0
    %462 = vmatprep.subr.mxu0 0.0
    %463 = vmatpush2.msra.mxu0 0.0
    %464 = vmatprep.subr.mxu0 0.0
    %465 = vmatpush2.msra.mxu0 0.0
    %466 = vmatprep.subr.mxu0 0.0
    %467 = vmatpush2.msra.mxu0 0.0
    %468 = vmatprep.subr.mxu0 0.0
    %469 = vmatpush2.msra.mxu0 0.0
    %470 = vmatprep.subr.mxu0 0.0
    %471 = vmatpush2.msra.mxu0 0.0
    %472 = vmatprep.subr.mxu0 0.0
    %473 = vmatpush2.msra.mxu0 0.0
    %474 = vmatprep.subr.mxu0 0.0
    %475 = vmatpush2.msra.mxu0 0.0
    %476 = vmatprep.subr.mxu0 0.0
    %477 = vmatpush2.msra.mxu0 0.0
    %478 = vmatprep.subr.mxu0 0.0
    %479 = vmatpush2.msra.mxu0 0.0
    %480 = vmatprep.subr.mxu0 0.0
    %481 = vmatpush2.msra.mxu0 0.0
    %482 = vmatprep.subr.mxu0 0.0
    %483 = vmatpush2.msra.mxu0 0.0
    %484 = vmatprep.subr.mxu0 0.0
    %485 = vmatpush2.msra.mxu0 0.0
    %486 = vmatprep.mubr.f32.mxu0 0.0
    %487 = vmatmul.mubr.f32.gmra.mxu0 %v119
    %v488 = vpop.f32.mrf.mxu0
    %v489 = vadd.f32 %v420, %v488
    %v490 = vpop.f32.mrf.mxu0
    %491 = vmatprep.mubr.f32.mxu0 0.0
    %492 = vmatmul.mubr.f32.gmra.mxu0 %v122
    %v493 = vpop.f32.mrf.mxu0
    %v494 = vadd.f32 %v420, %v493
    %v495 = vpop.f32.mrf.mxu0
    %496 = vmatprep.mubr.f32.mxu0 0.0
    %497 = vmatmul.mubr.f32.gmra.mxu0 %v125
    %v498 = vpop.f32.mrf.mxu0
    %v499 = vadd.f32 %v420, %v498
    %v500 = vpop.f32.mrf.mxu0
    %501 = vmatprep.mubr.f32.mxu0 0.0
    %502 = vmatmul.mubr.f32.gmra.mxu0 %v128
    %v503 = vpop.f32.mrf.mxu0
    %v504 = vadd.f32 %v420, %v503
    %v505 = vpop.f32.mrf.mxu0
    %506 = vmatprep.mubr.f32.mxu0 0.0
    %507 = vmatmul.mubr.f32.gmra.mxu0 %v131
    %v508 = vpop.f32.mrf.mxu0
    %v509 = vadd.f32 %v420, %v508
    %v510 = vpop.f32.mrf.mxu0
    %511 = vmatprep.mubr.f32.mxu0 0.0
    %512 = vmatmul.mubr.f32.gmra.mxu0 %v134
    %v513 = vpop.f32.mrf.mxu0
    %v514 = vadd.f32 %v420, %v513
    %v515 = vpop.f32.mrf.mxu0
    %516 = vmatprep.mubr.f32.mxu0 0.0
    %517 = vmatmul.mubr.f32.gmra.mxu0 %v137
    %v518 = vpop.f32.mrf.mxu0
    %v519 = vadd.f32 %v420, %v518
    %v520 = vpop.f32.mrf.mxu0
    %521 = vmatprep.mubr.f32.mxu0 0.0
    %522 = vmatmul.mubr.f32.gmra.mxu0 %v140
    %v523 = vpop.f32.mrf.mxu0
    %v524 = vadd.f32 %v420, %v523
    %v525 = vpop.f32.mrf.mxu0
    %526 = vdwg.mxu0
    %v527 = vsub.f32 1.0, %v110
    %v529 = vlaneseq
    %v530 = vshrl.u32 %v529, 7
    %v531 = vsub.s32 0, %v530
    %v532 = vrot.slane %v110, %v531
    %v534 = vmul.f32 %v532, %v489
    %v535 = vmul.f32 %v532, %v494
    %v536 = vmul.f32 %v532, %v499
    %v537 = vmul.f32 %v532, %v504
    %v538 = vmul.f32 %v532, %v509
    %v539 = vmul.f32 %v532, %v514
    %v540 = vmul.f32 %v532, %v519
    %v541 = vmul.f32 %v532, %v524
    %s542 = smul.u32 4, 8
    %s543 = smul.u32 %s542, 1
    %s544 = sshll.u32 %s543, 4
    %545 = dma.done [#allocation3], %s544
    %v546 = vld [vmem:[#allocation2] sm:$0xf]
    %v547 = vld [vmem:[#allocation2 + $0x4] sm:$0xf]
    %v548 = vld [vmem:[#allocation2 + $0x8] sm:$0xf]
    %v549 = vld [vmem:[#allocation2 + $0xc] sm:$0xf]
    %v550 = vld [vmem:[#allocation2 + $0x10] sm:$0xf]
    %v551 = vld [vmem:[#allocation2 + $0x14] sm:$0xf]
    %v552 = vld [vmem:[#allocation2 + $0x18] sm:$0xf]
    %v553 = vld [vmem:[#allocation2 + $0x1c] sm:$0xf]
    %v554 = vpack.c.bf16 %v494, %v489
    %v555 = vpack.c.bf16 %v504, %v499
    %v556 = vpack.c.bf16 %v514, %v509
    %v557 = vpack.c.bf16 %v524, %v519
    %v558 = vunpack.c.l.bf16 %v554
    %v559 = vunpack.c.h.bf16 %v554
    %v560 = vunpack.c.l.bf16 %v555
    %v561 = vunpack.c.h.bf16 %v555
    %v562 = vunpack.c.l.bf16 %v556
    %v563 = vunpack.c.h.bf16 %v556
    %v564 = vunpack.c.l.bf16 %v557
    %v565 = vunpack.c.h.bf16 %v557
    %v566 = vsub.f32 %v489, %v558
    %v567 = vsub.f32 %v494, %v559
    %v568 = vsub.f32 %v499, %v560
    %v569 = vsub.f32 %v504, %v561
    %v570 = vsub.f32 %v509, %v562
    %v571 = vsub.f32 %v514, %v563
    %v572 = vsub.f32 %v519, %v564
    %v573 = vsub.f32 %v524, %v565
    %v574 = vpack.c.bf16 %v567, %v566
    %v575 = vpack.c.bf16 %v569, %v568
    %v576 = vpack.c.bf16 %v571, %v570
    %v577 = vpack.c.bf16 %v573, %v572
    %v586 = vunpack.c.l.b16 %v546
    %v587 = vunpack.c.l.b16 %v547
    %v588 = vunpack.c.l.b16 %v548
    %v589 = vunpack.c.l.b16 %v549
    %v590 = vunpack.c.l.b16 %v550
    %v591 = vunpack.c.l.b16 %v551
    %v592 = vunpack.c.l.b16 %v552
    %v593 = vunpack.c.l.b16 %v553
    %v594 = vpack.c.b16 %v587, %v586
    %v595 = vpack.c.b16 %v589, %v588
    %v596 = vpack.c.b16 %v591, %v590
    %v597 = vpack.c.b16 %v593, %v592
    %vm598 = vcmask 523264
    %v600 = vsel %vm598, %v594, 0
    %v603 = vsel %vm598, %v595, 0
    %v606 = vsel %vm598, %v596, 0
    %v609 = vsel %vm598, %v597, 0
    %611 = vmatprep.subr.bf16.mxu0 0
    %612 = vmatpush1.bf16.msra.mxu0 0
    %613 = vmatprep.subr.bf16.mxu0 0
    %614 = vmatpush1.bf16.msra.mxu0 0
    %615 = vmatprep.subr.bf16.mxu0 0
    %616 = vmatpush1.bf16.msra.mxu0 0
    %617 = vmatprep.subr.bf16.mxu0 0
    %618 = vmatpush1.bf16.msra.mxu0 0
    %619 = vmatprep.subr.bf16.mxu0 %v577
    %620 = vmatpush1.bf16.msra.mxu0 %v557
    %621 = vmatprep.subr.bf16.mxu0 %v576
    %622 = vmatpush1.bf16.msra.mxu0 %v556
    %623 = vmatprep.subr.bf16.mxu0 %v575
    %624 = vmatpush1.bf16.msra.mxu0 %v555
    %625 = vmatprep.subr.bf16.mxu0 %v574
    %626 = vmatpush1.bf16.msra.mxu0 %v554
    %627 = vmatprep.subr.bf16.mxu0 0
    %628 = vmatpush2.bf16.msra.mxu0 0
    %629 = vmatprep.subr.bf16.mxu0 0
    %630 = vmatpush2.bf16.msra.mxu0 0
    %631 = vmatprep.subr.bf16.mxu0 0
    %632 = vmatpush2.bf16.msra.mxu0 0
    %633 = vmatprep.subr.bf16.mxu0 0
    %634 = vmatpush2.bf16.msra.mxu0 0
    %635 = vmatprep.subr.bf16.mxu0 0
    %636 = vmatpush2.bf16.msra.mxu0 0
    %637 = vmatprep.subr.bf16.mxu0 0
    %638 = vmatpush2.bf16.msra.mxu0 0
    %639 = vmatprep.subr.bf16.mxu0 0
    %640 = vmatpush2.bf16.msra.mxu0 0
    %641 = vmatprep.subr.bf16.mxu0 0
    %642 = vmatpush2.bf16.msra.mxu0 0
    %643 = vmatprep.mubr.bf16.mxu0 0
    %644 = vmatmul.mubr.bf16.gmra.mxu0 %v600
    %v645 = vpop.f32.mrf.mxu0
    %v646 = vadd.f32 0.0, %v645
    %v647 = vpop.f32.mrf.mxu0
    %v648 = vadd.f32 0.0, %v647
    %v649 = vpop.f32.mrf.mxu0
    %v650 = vadd.f32 0.0, %v649
    %v651 = vpop.f32.mrf.mxu0
    %v652 = vadd.f32 0.0, %v651
    %653 = vmatprep.mubr.bf16.mxu0 0
    %654 = vmatmul.mubr.bf16.gmra.mxu0 %v603
    %v655 = vpop.f32.mrf.mxu0
    %v656 = vadd.f32 0.0, %v655
    %v657 = vpop.f32.mrf.mxu0
    %v658 = vadd.f32 0.0, %v657
    %v659 = vpop.f32.mrf.mxu0
    %v660 = vadd.f32 0.0, %v659
    %v661 = vpop.f32.mrf.mxu0
    %v662 = vadd.f32 0.0, %v661
    %663 = vmatprep.mubr.bf16.mxu0 0
    %664 = vmatmul.mubr.bf16.gmra.mxu0 %v606
    %v665 = vpop.f32.mrf.mxu0
    %v666 = vadd.f32 0.0, %v665
    %v667 = vpop.f32.mrf.mxu0
    %v668 = vadd.f32 0.0, %v667
    %v669 = vpop.f32.mrf.mxu0
    %v670 = vadd.f32 0.0, %v669
    %v671 = vpop.f32.mrf.mxu0
    %v672 = vadd.f32 0.0, %v671
    %673 = vmatprep.mubr.bf16.mxu0 0
    %674 = vmatmul.mubr.bf16.gmra.mxu0 %v609
    %v675 = vpop.f32.mrf.mxu0
    %v676 = vadd.f32 0.0, %v675
    %v677 = vpop.f32.mrf.mxu0
    %v678 = vadd.f32 0.0, %v677
    %v679 = vpop.f32.mrf.mxu0
    %v680 = vadd.f32 0.0, %v679
    %v681 = vpop.f32.mrf.mxu0
    %v682 = vadd.f32 0.0, %v681
    %683 = vdwg.mxu0
    %v684 = vadd.f32 %v646, %v648
    %v685 = vadd.f32 %v650, %v652
    %v686 = vadd.f32 %v656, %v658
    %v687 = vadd.f32 %v660, %v662
    %v688 = vadd.f32 %v666, %v668
    %v689 = vadd.f32 %v670, %v672
    %v690 = vadd.f32 %v676, %v678
    %v691 = vadd.f32 %v680, %v682
    %v692 = vsub.f32 %v489, %v684
    %v693 = vsub.f32 %v494, %v685
    %v694 = vsub.f32 %v499, %v686
    %v695 = vsub.f32 %v504, %v687
    %v696 = vsub.f32 %v509, %v688
    %v697 = vsub.f32 %v514, %v689
    %v698 = vsub.f32 %v519, %v690
    %v699 = vsub.f32 %v524, %v691
    %v701 = vlaneseq
    %v702 = vshrl.u32 %v701, 7
    %v703 = vsub.s32 0, %v702
    %v704 = vrot.slane %v527, %v703
    %v706 = vmul.f32 %v704, %v692
    %v707 = vmul.f32 %v704, %v693
    %v708 = vmul.f32 %v704, %v694
    %v709 = vmul.f32 %v704, %v695
    %v710 = vmul.f32 %v704, %v696
    %v711 = vmul.f32 %v704, %v697
    %v712 = vmul.f32 %v704, %v698
    %v713 = vmul.f32 %v704, %v699
    %v714 = vadd.f32 %v706, %v534
    %v715 = vadd.f32 %v707, %v535
    %v716 = vadd.f32 %v708, %v536
    %v717 = vadd.f32 %v709, %v537
    %v718 = vadd.f32 %v710, %v538
    %v719 = vadd.f32 %v711, %v539
    %v720 = vadd.f32 %v712, %v540
    %v721 = vadd.f32 %v713, %v541
    %v722 = vpack.c.bf16 %v715, %v714
    %v723 = vpack.c.bf16 %v717, %v716
    %v724 = vpack.c.bf16 %v719, %v718
    %v725 = vpack.c.bf16 %v721, %v720
    %v726 = vunpack.c.l.bf16 %v722
    %v727 = vunpack.c.h.bf16 %v722
    %v728 = vunpack.c.l.bf16 %v723
    %v729 = vunpack.c.h.bf16 %v723
    %v730 = vunpack.c.l.bf16 %v724
    %v731 = vunpack.c.h.bf16 %v724
    %v732 = vunpack.c.l.bf16 %v725
    %v733 = vunpack.c.h.bf16 %v725
    %v734 = vsub.f32 %v714, %v726
    %v735 = vsub.f32 %v715, %v727
    %v736 = vsub.f32 %v716, %v728
    %v737 = vsub.f32 %v717, %v729
    %v738 = vsub.f32 %v718, %v730
    %v739 = vsub.f32 %v719, %v731
    %v740 = vsub.f32 %v720, %v732
    %v741 = vsub.f32 %v721, %v733
    %v742 = vpack.c.bf16 %v735, %v734
    %v743 = vpack.c.bf16 %v737, %v736
    %v744 = vpack.c.bf16 %v739, %v738
    %v745 = vpack.c.bf16 %v741, %v740
    %746 = vmatprep.subr.bf16.mxu0 0
    %747 = vmatpush1.bf16.msra.mxu0 0
    %748 = vmatprep.subr.bf16.mxu0 0
    %749 = vmatpush1.bf16.msra.mxu0 0
    %750 = vmatprep.subr.bf16.mxu0 0
    %751 = vmatpush1.bf16.msra.mxu0 0
    %752 = vmatprep.subr.bf16.mxu0 0
    %753 = vmatpush1.bf16.msra.mxu0 0
    %754 = vmatprep.subr.bf16.mxu0 %v745
    %755 = vmatpush1.bf16.msra.mxu0 %v725
    %756 = vmatprep.subr.bf16.mxu0 %v744
    %757 = vmatpush1.bf16.msra.mxu0 %v724
    %758 = vmatprep.subr.bf16.mxu0 %v743
    %759 = vmatpush1.bf16.msra.mxu0 %v723
    %760 = vmatprep.subr.bf16.mxu0 %v742
    %761 = vmatpush1.bf16.msra.mxu0 %v722
    %762 = vmatprep.subr.bf16.mxu0 0
    %763 = vmatpush2.bf16.msra.mxu0 0
    %764 = vmatprep.subr.bf16.mxu0 0
    %765 = vmatpush2.bf16.msra.mxu0 0
    %766 = vmatprep.subr.bf16.mxu0 0
    %767 = vmatpush2.bf16.msra.mxu0 0
    %768 = vmatprep.subr.bf16.mxu0 0
    %769 = vmatpush2.bf16.msra.mxu0 0
    %770 = vmatprep.subr.bf16.mxu0 0
    %771 = vmatpush2.bf16.msra.mxu0 0
    %772 = vmatprep.subr.bf16.mxu0 0
    %773 = vmatpush2.bf16.msra.mxu0 0
    %774 = vmatprep.subr.bf16.mxu0 0
    %775 = vmatpush2.bf16.msra.mxu0 0
    %776 = vmatprep.subr.bf16.mxu0 0
    %777 = vmatpush2.bf16.msra.mxu0 0
    %778 = vmatprep.mubr.bf16.mxu0 0
    %779 = vmatmul.mubr.bf16.gmra.mxu0 %v600
    %v780 = vpop.f32.mrf.mxu0
    %v781 = vadd.f32 0.0, %v780
    %v782 = vpop.f32.mrf.mxu0
    %v783 = vadd.f32 0.0, %v782
    %v784 = vpop.f32.mrf.mxu0
    %v785 = vadd.f32 0.0, %v784
    %v786 = vpop.f32.mrf.mxu0
    %v787 = vadd.f32 0.0, %v786
    %788 = vmatprep.mubr.bf16.mxu0 0
    %789 = vmatmul.mubr.bf16.gmra.mxu0 %v603
    %v790 = vpop.f32.mrf.mxu0
    %v791 = vadd.f32 0.0, %v790
    %v792 = vpop.f32.mrf.mxu0
    %v793 = vadd.f32 0.0, %v792
    %v794 = vpop.f32.mrf.mxu0
    %v795 = vadd.f32 0.0, %v794
    %v796 = vpop.f32.mrf.mxu0
    %v797 = vadd.f32 0.0, %v796
    %798 = vmatprep.mubr.bf16.mxu0 0
    %799 = vmatmul.mubr.bf16.gmra.mxu0 %v606
    %v800 = vpop.f32.mrf.mxu0
    %v801 = vadd.f32 0.0, %v800
    %v802 = vpop.f32.mrf.mxu0
    %v803 = vadd.f32 0.0, %v802
    %v804 = vpop.f32.mrf.mxu0
    %v805 = vadd.f32 0.0, %v804
    %v806 = vpop.f32.mrf.mxu0
    %v807 = vadd.f32 0.0, %v806
    %808 = vmatprep.mubr.bf16.mxu0 0
    %809 = vmatmul.mubr.bf16.gmra.mxu0 %v609
    %v810 = vpop.f32.mrf.mxu0
    %v811 = vadd.f32 0.0, %v810
    %v812 = vpop.f32.mrf.mxu0
    %v813 = vadd.f32 0.0, %v812
    %v814 = vpop.f32.mrf.mxu0
    %v815 = vadd.f32 0.0, %v814
    %v816 = vpop.f32.mrf.mxu0
    %v817 = vadd.f32 0.0, %v816
    %818 = vdwg.mxu0
    %v819 = vadd.f32 %v781, %v783
    %v820 = vadd.f32 %v785, %v787
    %v821 = vadd.f32 %v791, %v793
    %v822 = vadd.f32 %v795, %v797
    %v823 = vadd.f32 %v801, %v803
    %v824 = vadd.f32 %v805, %v807
    %v825 = vadd.f32 %v811, %v813
    %v826 = vadd.f32 %v815, %v817
    %v827 = vsub.f32 %v714, %v819
    %v828 = vsub.f32 %v715, %v820
    %v829 = vsub.f32 %v716, %v821
    %v830 = vsub.f32 %v717, %v822
    %v831 = vsub.f32 %v718, %v823
    %v832 = vsub.f32 %v719, %v824
    %v833 = vsub.f32 %v720, %v825
    %v834 = vsub.f32 %v721, %v826
    %v835 = vmul.f32 %v704, %v827
    %v836 = vmul.f32 %v704, %v828
    %v837 = vmul.f32 %v704, %v829
    %v838 = vmul.f32 %v704, %v830
    %v839 = vmul.f32 %v704, %v831
    %v840 = vmul.f32 %v704, %v832
    %v841 = vmul.f32 %v704, %v833
    %v842 = vmul.f32 %v704, %v834
    %v843 = vadd.f32 %v835, %v534
    %v844 = vadd.f32 %v836, %v535
    %v845 = vadd.f32 %v837, %v536
    %v846 = vadd.f32 %v838, %v537
    %v847 = vadd.f32 %v839, %v538
    %v848 = vadd.f32 %v840, %v539
    %v849 = vadd.f32 %v841, %v540
    %v850 = vadd.f32 %v842, %v541
    %v851 = vpack.c.bf16 %v844, %v843
    %v852 = vpack.c.bf16 %v846, %v845
    %v853 = vpack.c.bf16 %v848, %v847
    %v854 = vpack.c.bf16 %v850, %v849
    %v855 = vunpack.c.l.bf16 %v851
    %v856 = vunpack.c.h.bf16 %v851
    %v857 = vunpack.c.l.bf16 %v852
    %v858 = vunpack.c.h.bf16 %v852
    %v859 = vunpack.c.l.bf16 %v853
    %v860 = vunpack.c.h.bf16 %v853
    %v861 = vunpack.c.l.bf16 %v854
    %v862 = vunpack.c.h.bf16 %v854
    %v863 = vsub.f32 %v843, %v855
    %v864 = vsub.f32 %v844, %v856
    %v865 = vsub.f32 %v845, %v857
    %v866 = vsub.f32 %v846, %v858
    %v867 = vsub.f32 %v847, %v859
    %v868 = vsub.f32 %v848, %v860
    %v869 = vsub.f32 %v849, %v861
    %v870 = vsub.f32 %v850, %v862
    %v871 = vpack.c.bf16 %v864, %v863
    %v872 = vpack.c.bf16 %v866, %v865
    %v873 = vpack.c.bf16 %v868, %v867
    %v874 = vpack.c.bf16 %v870, %v869
    %875 = vmatprep.subr.bf16.mxu0 0
    %876 = vmatpush1.bf16.msra.mxu0 0
    %877 = vmatprep.subr.bf16.mxu0 0
    %878 = vmatpush1.bf16.msra.mxu0 0
    %879 = vmatprep.subr.bf16.mxu0 0
    %880 = vmatpush1.bf16.msra.mxu0 0
    %881 = vmatprep.subr.bf16.mxu0 0
    %882 = vmatpush1.bf16.msra.mxu0 0
    %883 = vmatprep.subr.bf16.mxu0 %v874
    %884 = vmatpush1.bf16.msra.mxu0 %v854
    %885 = vmatprep.subr.bf16.mxu0 %v873
    %886 = vmatpush1.bf16.msra.mxu0 %v853
    %887 = vmatprep.subr.bf16.mxu0 %v872
    %888 = vmatpush1.bf16.msra.mxu0 %v852
    %889 = vmatprep.subr.bf16.mxu0 %v871
    %890 = vmatpush1.bf16.msra.mxu0 %v851
    %891 = vmatprep.subr.bf16.mxu0 0
    %892 = vmatpush2.bf16.msra.mxu0 0
    %893 = vmatprep.subr.bf16.mxu0 0
    %894 = vmatpush2.bf16.msra.mxu0 0
    %895 = vmatprep.subr.bf16.mxu0 0
    %896 = vmatpush2.bf16.msra.mxu0 0
    %897 = vmatprep.subr.bf16.mxu0 0
    %898 = vmatpush2.bf16.msra.mxu0 0
    %899 = vmatprep.subr.bf16.mxu0 0
    %900 = vmatpush2.bf16.msra.mxu0 0
    %901 = vmatprep.subr.bf16.mxu0 0
    %902 = vmatpush2.bf16.msra.mxu0 0
    %903 = vmatprep.subr.bf16.mxu0 0
    %904 = vmatpush2.bf16.msra.mxu0 0
    %905 = vmatprep.subr.bf16.mxu0 0
    %906 = vmatpush2.bf16.msra.mxu0 0
    %907 = vmatprep.mubr.bf16.mxu0 0
    %908 = vmatmul.mubr.bf16.gmra.mxu0 %v600
    %v909 = vpop.f32.mrf.mxu0
    %v910 = vadd.f32 0.0, %v909
    %v911 = vpop.f32.mrf.mxu0
    %v912 = vadd.f32 0.0, %v911
    %v913 = vpop.f32.mrf.mxu0
    %v914 = vadd.f32 0.0, %v913
    %v915 = vpop.f32.mrf.mxu0
    %v916 = vadd.f32 0.0, %v915
    %917 = vmatprep.mubr.bf16.mxu0 0
    %918 = vmatmul.mubr.bf16.gmra.mxu0 %v603
    %v919 = vpop.f32.mrf.mxu0
    %v920 = vadd.f32 0.0, %v919
    %v921 = vpop.f32.mrf.mxu0
    %v922 = vadd.f32 0.0, %v921
    %v923 = vpop.f32.mrf.mxu0
    %v924 = vadd.f32 0.0, %v923
    %v925 = vpop.f32.mrf.mxu0
    %v926 = vadd.f32 0.0, %v925
    %927 = vmatprep.mubr.bf16.mxu0 0
    %928 = vmatmul.mubr.bf16.gmra.mxu0 %v606
    %v929 = vpop.f32.mrf.mxu0
    %v930 = vadd.f32 0.0, %v929
    %v931 = vpop.f32.mrf.mxu0
    %v932 = vadd.f32 0.0, %v931
    %v933 = vpop.f32.mrf.mxu0
    %v934 = vadd.f32 0.0, %v933
    %v935 = vpop.f32.mrf.mxu0
    %v936 = vadd.f32 0.0, %v935
    %937 = vmatprep.mubr.bf16.mxu0 0
    %938 = vmatmul.mubr.bf16.gmra.mxu0 %v609
    %v939 = vpop.f32.mrf.mxu0
    %v940 = vadd.f32 0.0, %v939
    %v941 = vpop.f32.mrf.mxu0
    %v942 = vadd.f32 0.0, %v941
    %v943 = vpop.f32.mrf.mxu0
    %v944 = vadd.f32 0.0, %v943
    %v945 = vpop.f32.mrf.mxu0
    %v946 = vadd.f32 0.0, %v945
    %947 = vdwg.mxu0
    %v948 = vadd.f32 %v910, %v912
    %v949 = vadd.f32 %v914, %v916
    %v950 = vadd.f32 %v920, %v922
    %v951 = vadd.f32 %v924, %v926
    %v952 = vadd.f32 %v930, %v932
    %v953 = vadd.f32 %v934, %v936
    %v954 = vadd.f32 %v940, %v942
    %v955 = vadd.f32 %v944, %v946
    %v956 = vsub.f32 %v843, %v948
    %v957 = vsub.f32 %v844, %v949
    %v958 = vsub.f32 %v845, %v950
    %v959 = vsub.f32 %v846, %v951
    %v960 = vsub.f32 %v847, %v952
    %v961 = vsub.f32 %v848, %v953
    %v962 = vsub.f32 %v849, %v954
    %v963 = vsub.f32 %v850, %v955
    %v964 = vmul.f32 %v704, %v956
    %v965 = vmul.f32 %v704, %v957
    %v966 = vmul.f32 %v704, %v958
    %v967 = vmul.f32 %v704, %v959
    %v968 = vmul.f32 %v704, %v960
    %v969 = vmul.f32 %v704, %v961
    %v970 = vmul.f32 %v704, %v962
    %v971 = vmul.f32 %v704, %v963
    %v972 = vadd.f32 %v964, %v534
    %v973 = vadd.f32 %v965, %v535
    %v974 = vadd.f32 %v966, %v536
    %v975 = vadd.f32 %v967, %v537
    %v976 = vadd.f32 %v968, %v538
    %v977 = vadd.f32 %v969, %v539
    %v978 = vadd.f32 %v970, %v540
    %v979 = vadd.f32 %v971, %v541
    %v980 = vpack.c.bf16 %v973, %v972
    %v981 = vpack.c.bf16 %v975, %v974
    %v982 = vpack.c.bf16 %v977, %v976
    %v983 = vpack.c.bf16 %v979, %v978
    %v984 = vunpack.c.l.bf16 %v980
    %v985 = vunpack.c.h.bf16 %v980
    %v986 = vunpack.c.l.bf16 %v981
    %v987 = vunpack.c.h.bf16 %v981
    %v988 = vunpack.c.l.bf16 %v982
    %v989 = vunpack.c.h.bf16 %v982
    %v990 = vunpack.c.l.bf16 %v983
    %v991 = vunpack.c.h.bf16 %v983
    %v992 = vsub.f32 %v972, %v984
    %v993 = vsub.f32 %v973, %v985
    %v994 = vsub.f32 %v974, %v986
    %v995 = vsub.f32 %v975, %v987
    %v996 = vsub.f32 %v976, %v988
    %v997 = vsub.f32 %v977, %v989
    %v998 = vsub.f32 %v978, %v990
    %v999 = vsub.f32 %v979, %v991
    %v1000 = vpack.c.bf16 %v993, %v992
    %v1001 = vpack.c.bf16 %v995, %v994
    %v1002 = vpack.c.bf16 %v997, %v996
    %v1003 = vpack.c.bf16 %v999, %v998
    %1004 = vmatprep.subr.bf16.mxu0 0
    %1005 = vmatpush1.bf16.msra.mxu0 0
    %1006 = vmatprep.subr.bf16.mxu0 0
    %1007 = vmatpush1.bf16.msra.mxu0 0
    %1008 = vmatprep.subr.bf16.mxu0 0
    %1009 = vmatpush1.bf16.msra.mxu0 0
    %1010 = vmatprep.subr.bf16.mxu0 0
    %1011 = vmatpush1.bf16.msra.mxu0 0
    %1012 = vmatprep.subr.bf16.mxu0 %v1003
    %1013 = vmatpush1.bf16.msra.mxu0 %v983
    %1014 = vmatprep.subr.bf16.mxu0 %v1002
    %1015 = vmatpush1.bf16.msra.mxu0 %v982
    %1016 = vmatprep.subr.bf16.mxu0 %v1001
    %1017 = vmatpush1.bf16.msra.mxu0 %v981
    %1018 = vmatprep.subr.bf16.mxu0 %v1000
    %1019 = vmatpush1.bf16.msra.mxu0 %v980
    %1020 = vmatprep.subr.bf16.mxu0 0
    %1021 = vmatpush2.bf16.msra.mxu0 0
    %1022 = vmatprep.subr.bf16.mxu0 0
    %1023 = vmatpush2.bf16.msra.mxu0 0
    %1024 = vmatprep.subr.bf16.mxu0 0
    %1025 = vmatpush2.bf16.msra.mxu0 0
    %1026 = vmatprep.subr.bf16.mxu0 0
    %1027 = vmatpush2.bf16.msra.mxu0 0
    %1028 = vmatprep.subr.bf16.mxu0 0
    %1029 = vmatpush2.bf16.msra.mxu0 0
    %1030 = vmatprep.subr.bf16.mxu0 0
    %1031 = vmatpush2.bf16.msra.mxu0 0
    %1032 = vmatprep.subr.bf16.mxu0 0
    %1033 = vmatpush2.bf16.msra.mxu0 0
    %1034 = vmatprep.subr.bf16.mxu0 0
    %1035 = vmatpush2.bf16.msra.mxu0 0
    %1036 = vmatprep.mubr.bf16.mxu0 0
    %1037 = vmatmul.mubr.bf16.gmra.mxu0 %v600
    %v1038 = vpop.f32.mrf.mxu0
    %v1039 = vadd.f32 0.0, %v1038
    %v1040 = vpop.f32.mrf.mxu0
    %v1041 = vadd.f32 0.0, %v1040
    %v1042 = vpop.f32.mrf.mxu0
    %v1043 = vadd.f32 0.0, %v1042
    %v1044 = vpop.f32.mrf.mxu0
    %v1045 = vadd.f32 0.0, %v1044
    %1046 = vmatprep.mubr.bf16.mxu0 0
    %1047 = vmatmul.mubr.bf16.gmra.mxu0 %v603
    %v1048 = vpop.f32.mrf.mxu0
    %v1049 = vadd.f32 0.0, %v1048
    %v1050 = vpop.f32.mrf.mxu0
    %v1051 = vadd.f32 0.0, %v1050
    %v1052 = vpop.f32.mrf.mxu0
    %v1053 = vadd.f32 0.0, %v1052
    %v1054 = vpop.f32.mrf.mxu0
    %v1055 = vadd.f32 0.0, %v1054
    %1056 = vmatprep.mubr.bf16.mxu0 0
    %1057 = vmatmul.mubr.bf16.gmra.mxu0 %v606
    %v1058 = vpop.f32.mrf.mxu0
    %v1059 = vadd.f32 0.0, %v1058
    %v1060 = vpop.f32.mrf.mxu0
    %v1061 = vadd.f32 0.0, %v1060
    %v1062 = vpop.f32.mrf.mxu0
    %v1063 = vadd.f32 0.0, %v1062
    %v1064 = vpop.f32.mrf.mxu0
    %v1065 = vadd.f32 0.0, %v1064
    %1066 = vmatprep.mubr.bf16.mxu0 0
    %1067 = vmatmul.mubr.bf16.gmra.mxu0 %v609
    %v1068 = vpop.f32.mrf.mxu0
    %v1069 = vadd.f32 0.0, %v1068
    %v1070 = vpop.f32.mrf.mxu0
    %v1071 = vadd.f32 0.0, %v1070
    %v1072 = vpop.f32.mrf.mxu0
    %v1073 = vadd.f32 0.0, %v1072
    %v1074 = vpop.f32.mrf.mxu0
    %v1075 = vadd.f32 0.0, %v1074
    %1076 = vdwg.mxu0
    %v1077 = vadd.f32 %v1039, %v1041
    %v1078 = vadd.f32 %v1043, %v1045
    %v1079 = vadd.f32 %v1049, %v1051
    %v1080 = vadd.f32 %v1053, %v1055
    %v1081 = vadd.f32 %v1059, %v1061
    %v1082 = vadd.f32 %v1063, %v1065
    %v1083 = vadd.f32 %v1069, %v1071
    %v1084 = vadd.f32 %v1073, %v1075
    %v1085 = vsub.f32 %v972, %v1077
    %v1086 = vsub.f32 %v973, %v1078
    %v1087 = vsub.f32 %v974, %v1079
    %v1088 = vsub.f32 %v975, %v1080
    %v1089 = vsub.f32 %v976, %v1081
    %v1090 = vsub.f32 %v977, %v1082
    %v1091 = vsub.f32 %v978, %v1083
    %v1092 = vsub.f32 %v979, %v1084
    %v1093 = vmul.f32 %v704, %v1085
    %v1094 = vmul.f32 %v704, %v1086
    %v1095 = vmul.f32 %v704, %v1087
    %v1096 = vmul.f32 %v704, %v1088
    %v1097 = vmul.f32 %v704, %v1089
    %v1098 = vmul.f32 %v704, %v1090
    %v1099 = vmul.f32 %v704, %v1091
    %v1100 = vmul.f32 %v704, %v1092
    %v1101 = vadd.f32 %v1093, %v534
    %v1102 = vadd.f32 %v1094, %v535
    %v1103 = vadd.f32 %v1095, %v536
    %v1104 = vadd.f32 %v1096, %v537
    %v1105 = vadd.f32 %v1097, %v538
    %v1106 = vadd.f32 %v1098, %v539
    %v1107 = vadd.f32 %v1099, %v540
    %v1108 = vadd.f32 %v1100, %v541
    %v1109 = vpack.c.bf16 %v1102, %v1101
    %v1110 = vpack.c.bf16 %v1104, %v1103
    %v1111 = vpack.c.bf16 %v1106, %v1105
    %v1112 = vpack.c.bf16 %v1108, %v1107
    %v1113 = vunpack.c.l.bf16 %v1109
    %v1114 = vunpack.c.h.bf16 %v1109
    %v1115 = vunpack.c.l.bf16 %v1110
    %v1116 = vunpack.c.h.bf16 %v1110
    %v1117 = vunpack.c.l.bf16 %v1111
    %v1118 = vunpack.c.h.bf16 %v1111
    %v1119 = vunpack.c.l.bf16 %v1112
    %v1120 = vunpack.c.h.bf16 %v1112
    %v1121 = vsub.f32 %v1101, %v1113
    %v1122 = vsub.f32 %v1102, %v1114
    %v1123 = vsub.f32 %v1103, %v1115
    %v1124 = vsub.f32 %v1104, %v1116
    %v1125 = vsub.f32 %v1105, %v1117
    %v1126 = vsub.f32 %v1106, %v1118
    %v1127 = vsub.f32 %v1107, %v1119
    %v1128 = vsub.f32 %v1108, %v1120
    %v1129 = vpack.c.bf16 %v1122, %v1121
    %v1130 = vpack.c.bf16 %v1124, %v1123
    %v1131 = vpack.c.bf16 %v1126, %v1125
    %v1132 = vpack.c.bf16 %v1128, %v1127
    %1133 = vmatprep.subr.bf16.mxu0 0
    %1134 = vmatpush1.bf16.msra.mxu0 0
    %1135 = vmatprep.subr.bf16.mxu0 0
    %1136 = vmatpush1.bf16.msra.mxu0 0
    %1137 = vmatprep.subr.bf16.mxu0 0
    %1138 = vmatpush1.bf16.msra.mxu0 0
    %1139 = vmatprep.subr.bf16.mxu0 0
    %1140 = vmatpush1.bf16.msra.mxu0 0
    %1141 = vmatprep.subr.bf16.mxu0 %v1132
    %1142 = vmatpush1.bf16.msra.mxu0 %v1112
    %1143 = vmatprep.subr.bf16.mxu0 %v1131
    %1144 = vmatpush1.bf16.msra.mxu0 %v1111
    %1145 = vmatprep.subr.bf16.mxu0 %v1130
    %1146 = vmatpush1.bf16.msra.mxu0 %v1110
    %1147 = vmatprep.subr.bf16.mxu0 %v1129
    %1148 = vmatpush1.bf16.msra.mxu0 %v1109
    %1149 = vmatprep.subr.bf16.mxu0 0
    %1150 = vmatpush2.bf16.msra.mxu0 0
    %1151 = vmatprep.subr.bf16.mxu0 0
    %1152 = vmatpush2.bf16.msra.mxu0 0
    %1153 = vmatprep.subr.bf16.mxu0 0
    %1154 = vmatpush2.bf16.msra.mxu0 0
    %1155 = vmatprep.subr.bf16.mxu0 0
    %1156 = vmatpush2.bf16.msra.mxu0 0
    %1157 = vmatprep.subr.bf16.mxu0 0
    %1158 = vmatpush2.bf16.msra.mxu0 0
    %1159 = vmatprep.subr.bf16.mxu0 0
    %1160 = vmatpush2.bf16.msra.mxu0 0
    %1161 = vmatprep.subr.bf16.mxu0 0
    %1162 = vmatpush2.bf16.msra.mxu0 0
    %1163 = vmatprep.subr.bf16.mxu0 0
    %1164 = vmatpush2.bf16.msra.mxu0 0
    %1165 = vmatprep.mubr.bf16.mxu0 0
    %1166 = vmatmul.mubr.bf16.gmra.mxu0 %v600
    %v1167 = vpop.f32.mrf.mxu0
    %v1168 = vadd.f32 0.0, %v1167
    %v1169 = vpop.f32.mrf.mxu0
    %v1170 = vadd.f32 0.0, %v1169
    %v1171 = vpop.f32.mrf.mxu0
    %v1172 = vadd.f32 0.0, %v1171
    %v1173 = vpop.f32.mrf.mxu0
    %v1174 = vadd.f32 0.0, %v1173
    %1175 = vmatprep.mubr.bf16.mxu0 0
    %1176 = vmatmul.mubr.bf16.gmra.mxu0 %v603
    %v1177 = vpop.f32.mrf.mxu0
    %v1178 = vadd.f32 0.0, %v1177
    %v1179 = vpop.f32.mrf.mxu0
    %v1180 = vadd.f32 0.0, %v1179
    %v1181 = vpop.f32.mrf.mxu0
    %v1182 = vadd.f32 0.0, %v1181
    %v1183 = vpop.f32.mrf.mxu0
    %v1184 = vadd.f32 0.0, %v1183
    %1185 = vmatprep.mubr.bf16.mxu0 0
    %1186 = vmatmul.mubr.bf16.gmra.mxu0 %v606
    %v1187 = vpop.f32.mrf.mxu0
    %v1188 = vadd.f32 0.0, %v1187
    %v1189 = vpop.f32.mrf.mxu0
    %v1190 = vadd.f32 0.0, %v1189
    %v1191 = vpop.f32.mrf.mxu0
    %v1192 = vadd.f32 0.0, %v1191
    %v1193 = vpop.f32.mrf.mxu0
    %v1194 = vadd.f32 0.0, %v1193
    %1195 = vmatprep.mubr.bf16.mxu0 0
    %1196 = vmatmul.mubr.bf16.gmra.mxu0 %v609
    %v1197 = vpop.f32.mrf.mxu0
    %v1198 = vadd.f32 0.0, %v1197
    %v1199 = vpop.f32.mrf.mxu0
    %v1200 = vadd.f32 0.0, %v1199
    %v1201 = vpop.f32.mrf.mxu0
    %v1202 = vadd.f32 0.0, %v1201
    %v1203 = vpop.f32.mrf.mxu0
    %v1204 = vadd.f32 0.0, %v1203
    %1205 = vdwg.mxu0
    %v1206 = vadd.f32 %v1168, %v1170
    %v1207 = vadd.f32 %v1172, %v1174
    %v1208 = vadd.f32 %v1178, %v1180
    %v1209 = vadd.f32 %v1182, %v1184
    %v1210 = vadd.f32 %v1188, %v1190
    %v1211 = vadd.f32 %v1192, %v1194
    %v1212 = vadd.f32 %v1198, %v1200
    %v1213 = vadd.f32 %v1202, %v1204
    %v1214 = vsub.f32 %v1101, %v1206
    %v1215 = vsub.f32 %v1102, %v1207
    %v1216 = vsub.f32 %v1103, %v1208
    %v1217 = vsub.f32 %v1104, %v1209
    %v1218 = vsub.f32 %v1105, %v1210
    %v1219 = vsub.f32 %v1106, %v1211
    %v1220 = vsub.f32 %v1107, %v1212
    %v1221 = vsub.f32 %v1108, %v1213
    %v1222 = vmul.f32 %v704, %v1214
    %v1223 = vmul.f32 %v704, %v1215
    %v1224 = vmul.f32 %v704, %v1216
    %v1225 = vmul.f32 %v704, %v1217
    %v1226 = vmul.f32 %v704, %v1218
    %v1227 = vmul.f32 %v704, %v1219
    %v1228 = vmul.f32 %v704, %v1220
    %v1229 = vmul.f32 %v704, %v1221
    %v1230 = vadd.f32 %v1222, %v534
    %v1231 = vadd.f32 %v1223, %v535
    %v1232 = vadd.f32 %v1224, %v536
    %v1233 = vadd.f32 %v1225, %v537
    %v1234 = vadd.f32 %v1226, %v538
    %v1235 = vadd.f32 %v1227, %v539
    %v1236 = vadd.f32 %v1228, %v540
    %v1237 = vadd.f32 %v1229, %v541
    %v1238 = vpack.c.bf16 %v1231, %v1230
    %v1239 = vpack.c.bf16 %v1233, %v1232
    %v1240 = vpack.c.bf16 %v1235, %v1234
    %v1241 = vpack.c.bf16 %v1237, %v1236
    %v1242 = vunpack.c.l.bf16 %v1238
    %v1243 = vunpack.c.h.bf16 %v1238
    %v1244 = vunpack.c.l.bf16 %v1239
    %v1245 = vunpack.c.h.bf16 %v1239
    %v1246 = vunpack.c.l.bf16 %v1240
    %v1247 = vunpack.c.h.bf16 %v1240
    %v1248 = vunpack.c.l.bf16 %v1241
    %v1249 = vunpack.c.h.bf16 %v1241
    %v1250 = vsub.f32 %v1230, %v1242
    %v1251 = vsub.f32 %v1231, %v1243
    %v1252 = vsub.f32 %v1232, %v1244
    %v1253 = vsub.f32 %v1233, %v1245
    %v1254 = vsub.f32 %v1234, %v1246
    %v1255 = vsub.f32 %v1235, %v1247
    %v1256 = vsub.f32 %v1236, %v1248
    %v1257 = vsub.f32 %v1237, %v1249
    %v1258 = vpack.c.bf16 %v1251, %v1250
    %v1259 = vpack.c.bf16 %v1253, %v1252
    %v1260 = vpack.c.bf16 %v1255, %v1254
    %v1261 = vpack.c.bf16 %v1257, %v1256
    %1262 = vmatprep.subr.bf16.mxu0 0
    %1263 = vmatpush1.bf16.msra.mxu0 0
    %1264 = vmatprep.subr.bf16.mxu0 0
    %1265 = vmatpush1.bf16.msra.mxu0 0
    %1266 = vmatprep.subr.bf16.mxu0 0
    %1267 = vmatpush1.bf16.msra.mxu0 0
    %1268 = vmatprep.subr.bf16.mxu0 0
    %1269 = vmatpush1.bf16.msra.mxu0 0
    %1270 = vmatprep.subr.bf16.mxu0 %v1261
    %1271 = vmatpush1.bf16.msra.mxu0 %v1241
    %1272 = vmatprep.subr.bf16.mxu0 %v1260
    %1273 = vmatpush1.bf16.msra.mxu0 %v1240
    %1274 = vmatprep.subr.bf16.mxu0 %v1259
    %1275 = vmatpush1.bf16.msra.mxu0 %v1239
    %1276 = vmatprep.subr.bf16.mxu0 %v1258
    %1277 = vmatpush1.bf16.msra.mxu0 %v1238
    %1278 = vmatprep.subr.bf16.mxu0 0
    %1279 = vmatpush2.bf16.msra.mxu0 0
    %1280 = vmatprep.subr.bf16.mxu0 0
    %1281 = vmatpush2.bf16.msra.mxu0 0
    %1282 = vmatprep.subr.bf16.mxu0 0
    %1283 = vmatpush2.bf16.msra.mxu0 0
    %1284 = vmatprep.subr.bf16.mxu0 0
    %1285 = vmatpush2.bf16.msra.mxu0 0
    %1286 = vmatprep.subr.bf16.mxu0 0
    %1287 = vmatpush2.bf16.msra.mxu0 0
    %1288 = vmatprep.subr.bf16.mxu0 0
    %1289 = vmatpush2.bf16.msra.mxu0 0
    %1290 = vmatprep.subr.bf16.mxu0 0
    %1291 = vmatpush2.bf16.msra.mxu0 0
    %1292 = vmatprep.subr.bf16.mxu0 0
    %1293 = vmatpush2.bf16.msra.mxu0 0
    %1294 = vmatprep.mubr.bf16.mxu0 0
    %1295 = vmatmul.mubr.bf16.gmra.mxu0 %v600
    %v1296 = vpop.f32.mrf.mxu0
    %v1297 = vadd.f32 0.0, %v1296
    %v1298 = vpop.f32.mrf.mxu0
    %v1299 = vadd.f32 0.0, %v1298
    %v1300 = vpop.f32.mrf.mxu0
    %v1301 = vadd.f32 0.0, %v1300
    %v1302 = vpop.f32.mrf.mxu0
    %v1303 = vadd.f32 0.0, %v1302
    %1304 = vmatprep.mubr.bf16.mxu0 0
    %1305 = vmatmul.mubr.bf16.gmra.mxu0 %v603
    %v1306 = vpop.f32.mrf.mxu0
    %v1307 = vadd.f32 0.0, %v1306
    %v1308 = vpop.f32.mrf.mxu0
    %v1309 = vadd.f32 0.0, %v1308
    %v1310 = vpop.f32.mrf.mxu0
    %v1311 = vadd.f32 0.0, %v1310
    %v1312 = vpop.f32.mrf.mxu0
    %v1313 = vadd.f32 0.0, %v1312
    %1314 = vmatprep.mubr.bf16.mxu0 0
    %1315 = vmatmul.mubr.bf16.gmra.mxu0 %v606
    %v1316 = vpop.f32.mrf.mxu0
    %v1317 = vadd.f32 0.0, %v1316
    %v1318 = vpop.f32.mrf.mxu0
    %v1319 = vadd.f32 0.0, %v1318
    %v1320 = vpop.f32.mrf.mxu0
    %v1321 = vadd.f32 0.0, %v1320
    %v1322 = vpop.f32.mrf.mxu0
    %v1323 = vadd.f32 0.0, %v1322
    %1324 = vmatprep.mubr.bf16.mxu0 0
    %1325 = vmatmul.mubr.bf16.gmra.mxu0 %v609
    %v1326 = vpop.f32.mrf.mxu0
    %v1327 = vadd.f32 0.0, %v1326
    %v1328 = vpop.f32.mrf.mxu0
    %v1329 = vadd.f32 0.0, %v1328
    %v1330 = vpop.f32.mrf.mxu0
    %v1331 = vadd.f32 0.0, %v1330
    %v1332 = vpop.f32.mrf.mxu0
    %v1333 = vadd.f32 0.0, %v1332
    %1334 = vdwg.mxu0
    %v1335 = vadd.f32 %v1297, %v1299
    %v1336 = vadd.f32 %v1301, %v1303
    %v1337 = vadd.f32 %v1307, %v1309
    %v1338 = vadd.f32 %v1311, %v1313
    %v1339 = vadd.f32 %v1317, %v1319
    %v1340 = vadd.f32 %v1321, %v1323
    %v1341 = vadd.f32 %v1327, %v1329
    %v1342 = vadd.f32 %v1331, %v1333
    %v1343 = vsub.f32 %v1230, %v1335
    %v1344 = vsub.f32 %v1231, %v1336
    %v1345 = vsub.f32 %v1232, %v1337
    %v1346 = vsub.f32 %v1233, %v1338
    %v1347 = vsub.f32 %v1234, %v1339
    %v1348 = vsub.f32 %v1235, %v1340
    %v1349 = vsub.f32 %v1236, %v1341
    %v1350 = vsub.f32 %v1237, %v1342
    %v1351 = vmul.f32 %v704, %v1343
    %v1352 = vmul.f32 %v704, %v1344
    %v1353 = vmul.f32 %v704, %v1345
    %v1354 = vmul.f32 %v704, %v1346
    %v1355 = vmul.f32 %v704, %v1347
    %v1356 = vmul.f32 %v704, %v1348
    %v1357 = vmul.f32 %v704, %v1349
    %v1358 = vmul.f32 %v704, %v1350
    %v1359 = vadd.f32 %v1351, %v534
    %v1360 = vadd.f32 %v1352, %v535
    %v1361 = vadd.f32 %v1353, %v536
    %v1362 = vadd.f32 %v1354, %v537
    %v1363 = vadd.f32 %v1355, %v538
    %v1364 = vadd.f32 %v1356, %v539
    %v1365 = vadd.f32 %v1357, %v540
    %v1366 = vadd.f32 %v1358, %v541
    %v1367 = vpack.c.bf16 %v1360, %v1359
    %v1368 = vpack.c.bf16 %v1362, %v1361
    %v1369 = vpack.c.bf16 %v1364, %v1363
    %v1370 = vpack.c.bf16 %v1366, %v1365
    %v1371 = vunpack.c.l.bf16 %v1367
    %v1372 = vunpack.c.h.bf16 %v1367
    %v1373 = vunpack.c.l.bf16 %v1368
    %v1374 = vunpack.c.h.bf16 %v1368
    %v1375 = vunpack.c.l.bf16 %v1369
    %v1376 = vunpack.c.h.bf16 %v1369
    %v1377 = vunpack.c.l.bf16 %v1370
    %v1378 = vunpack.c.h.bf16 %v1370
    %v1379 = vsub.f32 %v1359, %v1371
    %v1380 = vsub.f32 %v1360, %v1372
    %v1381 = vsub.f32 %v1361, %v1373
    %v1382 = vsub.f32 %v1362, %v1374
    %v1383 = vsub.f32 %v1363, %v1375
    %v1384 = vsub.f32 %v1364, %v1376
    %v1385 = vsub.f32 %v1365, %v1377
    %v1386 = vsub.f32 %v1366, %v1378
    %v1387 = vpack.c.bf16 %v1380, %v1379
    %v1388 = vpack.c.bf16 %v1382, %v1381
    %v1389 = vpack.c.bf16 %v1384, %v1383
    %v1390 = vpack.c.bf16 %v1386, %v1385
    %1391 = vmatprep.subr.bf16.mxu0 0
    %1392 = vmatpush1.bf16.msra.mxu0 0
    %1393 = vmatprep.subr.bf16.mxu0 0
    %1394 = vmatpush1.bf16.msra.mxu0 0
    %1395 = vmatprep.subr.bf16.mxu0 0
    %1396 = vmatpush1.bf16.msra.mxu0 0
    %1397 = vmatprep.subr.bf16.mxu0 0
    %1398 = vmatpush1.bf16.msra.mxu0 0
    %1399 = vmatprep.subr.bf16.mxu0 %v1390
    %1400 = vmatpush1.bf16.msra.mxu0 %v1370
    %1401 = vmatprep.subr.bf16.mxu0 %v1389
    %1402 = vmatpush1.bf16.msra.mxu0 %v1369
    %1403 = vmatprep.subr.bf16.mxu0 %v1388
    %1404 = vmatpush1.bf16.msra.mxu0 %v1368
    %1405 = vmatprep.subr.bf16.mxu0 %v1387
    %1406 = vmatpush1.bf16.msra.mxu0 %v1367
    %1407 = vmatprep.subr.bf16.mxu0 0
    %1408 = vmatpush2.bf16.msra.mxu0 0
    %1409 = vmatprep.subr.bf16.mxu0 0
    %1410 = vmatpush2.bf16.msra.mxu0 0
    %1411 = vmatprep.subr.bf16.mxu0 0
    %1412 = vmatpush2.bf16.msra.mxu0 0
    %1413 = vmatprep.subr.bf16.mxu0 0
    %1414 = vmatpush2.bf16.msra.mxu0 0
    %1415 = vmatprep.subr.bf16.mxu0 0
    %1416 = vmatpush2.bf16.msra.mxu0 0
    %1417 = vmatprep.subr.bf16.mxu0 0
    %1418 = vmatpush2.bf16.msra.mxu0 0
    %1419 = vmatprep.subr.bf16.mxu0 0
    %1420 = vmatpush2.bf16.msra.mxu0 0
    %1421 = vmatprep.subr.bf16.mxu0 0
    %1422 = vmatpush2.bf16.msra.mxu0 0
    %1423 = vmatprep.mubr.bf16.mxu0 0
    %1424 = vmatmul.mubr.bf16.gmra.mxu0 %v600
    %v1425 = vpop.f32.mrf.mxu0
    %v1426 = vadd.f32 0.0, %v1425
    %v1427 = vpop.f32.mrf.mxu0
    %v1428 = vadd.f32 0.0, %v1427
    %v1429 = vpop.f32.mrf.mxu0
    %v1430 = vadd.f32 0.0, %v1429
    %v1431 = vpop.f32.mrf.mxu0
    %v1432 = vadd.f32 0.0, %v1431
    %1433 = vmatprep.mubr.bf16.mxu0 0
    %1434 = vmatmul.mubr.bf16.gmra.mxu0 %v603
    %v1435 = vpop.f32.mrf.mxu0
    %v1436 = vadd.f32 0.0, %v1435
    %v1437 = vpop.f32.mrf.mxu0
    %v1438 = vadd.f32 0.0, %v1437
    %v1439 = vpop.f32.mrf.mxu0
    %v1440 = vadd.f32 0.0, %v1439
    %v1441 = vpop.f32.mrf.mxu0
    %v1442 = vadd.f32 0.0, %v1441
    %1443 = vmatprep.mubr.bf16.mxu0 0
    %1444 = vmatmul.mubr.bf16.gmra.mxu0 %v606
    %v1445 = vpop.f32.mrf.mxu0
    %v1446 = vadd.f32 0.0, %v1445
    %v1447 = vpop.f32.mrf.mxu0
    %v1448 = vadd.f32 0.0, %v1447
    %v1449 = vpop.f32.mrf.mxu0
    %v1450 = vadd.f32 0.0, %v1449
    %v1451 = vpop.f32.mrf.mxu0
    %v1452 = vadd.f32 0.0, %v1451
    %1453 = vmatprep.mubr.bf16.mxu0 0
    %1454 = vmatmul.mubr.bf16.gmra.mxu0 %v609
    %v1455 = vpop.f32.mrf.mxu0
    %v1456 = vadd.f32 0.0, %v1455
    %v1457 = vpop.f32.mrf.mxu0
    %v1458 = vadd.f32 0.0, %v1457
    %v1459 = vpop.f32.mrf.mxu0
    %v1460 = vadd.f32 0.0, %v1459
    %v1461 = vpop.f32.mrf.mxu0
    %v1462 = vadd.f32 0.0, %v1461
    %1463 = vdwg.mxu0
    %v1464 = vadd.f32 %v1426, %v1428
    %v1465 = vadd.f32 %v1430, %v1432
    %v1466 = vadd.f32 %v1436, %v1438
    %v1467 = vadd.f32 %v1440, %v1442
    %v1468 = vadd.f32 %v1446, %v1448
    %v1469 = vadd.f32 %v1450, %v1452
    %v1470 = vadd.f32 %v1456, %v1458
    %v1471 = vadd.f32 %v1460, %v1462
    %v1472 = vsub.f32 %v1359, %v1464
    %v1473 = vsub.f32 %v1360, %v1465
    %v1474 = vsub.f32 %v1361, %v1466
    %v1475 = vsub.f32 %v1362, %v1467
    %v1476 = vsub.f32 %v1363, %v1468
    %v1477 = vsub.f32 %v1364, %v1469
    %v1478 = vsub.f32 %v1365, %v1470
    %v1479 = vsub.f32 %v1366, %v1471
    %v1480 = vmul.f32 %v704, %v1472
    %v1481 = vmul.f32 %v704, %v1473
    %v1482 = vmul.f32 %v704, %v1474
    %v1483 = vmul.f32 %v704, %v1475
    %v1484 = vmul.f32 %v704, %v1476
    %v1485 = vmul.f32 %v704, %v1477
    %v1486 = vmul.f32 %v704, %v1478
    %v1487 = vmul.f32 %v704, %v1479
    %v1488 = vadd.f32 %v1480, %v534
    %v1489 = vadd.f32 %v1481, %v535
    %v1490 = vadd.f32 %v1482, %v536
    %v1491 = vadd.f32 %v1483, %v537
    %v1492 = vadd.f32 %v1484, %v538
    %v1493 = vadd.f32 %v1485, %v539
    %v1494 = vadd.f32 %v1486, %v540
    %v1495 = vadd.f32 %v1487, %v541
    %v1496 = vpack.c.bf16 %v1489, %v1488
    %v1497 = vpack.c.bf16 %v1491, %v1490
    %v1498 = vpack.c.bf16 %v1493, %v1492
    %v1499 = vpack.c.bf16 %v1495, %v1494
    %v1500 = vunpack.c.l.bf16 %v1496
    %v1501 = vunpack.c.h.bf16 %v1496
    %v1502 = vunpack.c.l.bf16 %v1497
    %v1503 = vunpack.c.h.bf16 %v1497
    %v1504 = vunpack.c.l.bf16 %v1498
    %v1505 = vunpack.c.h.bf16 %v1498
    %v1506 = vunpack.c.l.bf16 %v1499
    %v1507 = vunpack.c.h.bf16 %v1499
    %v1508 = vsub.f32 %v1488, %v1500
    %v1509 = vsub.f32 %v1489, %v1501
    %v1510 = vsub.f32 %v1490, %v1502
    %v1511 = vsub.f32 %v1491, %v1503
    %v1512 = vsub.f32 %v1492, %v1504
    %v1513 = vsub.f32 %v1493, %v1505
    %v1514 = vsub.f32 %v1494, %v1506
    %v1515 = vsub.f32 %v1495, %v1507
    %v1516 = vpack.c.bf16 %v1509, %v1508
    %v1517 = vpack.c.bf16 %v1511, %v1510
    %v1518 = vpack.c.bf16 %v1513, %v1512
    %v1519 = vpack.c.bf16 %v1515, %v1514
    %1520 = vmatprep.subr.bf16.mxu0 0
    %1521 = vmatpush1.bf16.msra.mxu0 0
    %1522 = vmatprep.subr.bf16.mxu0 0
    %1523 = vmatpush1.bf16.msra.mxu0 0
    %1524 = vmatprep.subr.bf16.mxu0 0
    %1525 = vmatpush1.bf16.msra.mxu0 0
    %1526 = vmatprep.subr.bf16.mxu0 0
    %1527 = vmatpush1.bf16.msra.mxu0 0
    %1528 = vmatprep.subr.bf16.mxu0 %v1519
    %1529 = vmatpush1.bf16.msra.mxu0 %v1499
    %1530 = vmatprep.subr.bf16.mxu0 %v1518
    %1531 = vmatpush1.bf16.msra.mxu0 %v1498
    %1532 = vmatprep.subr.bf16.mxu0 %v1517
    %1533 = vmatpush1.bf16.msra.mxu0 %v1497
    %1534 = vmatprep.subr.bf16.mxu0 %v1516
    %1535 = vmatpush1.bf16.msra.mxu0 %v1496
    %1536 = vmatprep.subr.bf16.mxu0 0
    %1537 = vmatpush2.bf16.msra.mxu0 0
    %1538 = vmatprep.subr.bf16.mxu0 0
    %1539 = vmatpush2.bf16.msra.mxu0 0
    %1540 = vmatprep.subr.bf16.mxu0 0
    %1541 = vmatpush2.bf16.msra.mxu0 0
    %1542 = vmatprep.subr.bf16.mxu0 0
    %1543 = vmatpush2.bf16.msra.mxu0 0
    %1544 = vmatprep.subr.bf16.mxu0 0
    %1545 = vmatpush2.bf16.msra.mxu0 0
    %1546 = vmatprep.subr.bf16.mxu0 0
    %1547 = vmatpush2.bf16.msra.mxu0 0
    %1548 = vmatprep.subr.bf16.mxu0 0
    %1549 = vmatpush2.bf16.msra.mxu0 0
    %1550 = vmatprep.subr.bf16.mxu0 0
    %1551 = vmatpush2.bf16.msra.mxu0 0
    %1552 = vmatprep.mubr.bf16.mxu0 0
    %1553 = vmatmul.mubr.bf16.gmra.mxu0 %v600
    %v1554 = vpop.f32.mrf.mxu0
    %v1555 = vadd.f32 0.0, %v1554
    %v1556 = vpop.f32.mrf.mxu0
    %v1557 = vadd.f32 0.0, %v1556
    %v1558 = vpop.f32.mrf.mxu0
    %v1559 = vadd.f32 0.0, %v1558
    %v1560 = vpop.f32.mrf.mxu0
    %v1561 = vadd.f32 0.0, %v1560
    %1562 = vmatprep.mubr.bf16.mxu0 0
    %1563 = vmatmul.mubr.bf16.gmra.mxu0 %v603
    %v1564 = vpop.f32.mrf.mxu0
    %v1565 = vadd.f32 0.0, %v1564
    %v1566 = vpop.f32.mrf.mxu0
    %v1567 = vadd.f32 0.0, %v1566
    %v1568 = vpop.f32.mrf.mxu0
    %v1569 = vadd.f32 0.0, %v1568
    %v1570 = vpop.f32.mrf.mxu0
    %v1571 = vadd.f32 0.0, %v1570
    %1572 = vmatprep.mubr.bf16.mxu0 0
    %1573 = vmatmul.mubr.bf16.gmra.mxu0 %v606
    %v1574 = vpop.f32.mrf.mxu0
    %v1575 = vadd.f32 0.0, %v1574
    %v1576 = vpop.f32.mrf.mxu0
    %v1577 = vadd.f32 0.0, %v1576
    %v1578 = vpop.f32.mrf.mxu0
    %v1579 = vadd.f32 0.0, %v1578
    %v1580 = vpop.f32.mrf.mxu0
    %v1581 = vadd.f32 0.0, %v1580
    %1582 = vmatprep.mubr.bf16.mxu0 0
    %1583 = vmatmul.mubr.bf16.gmra.mxu0 %v609
    %v1584 = vpop.f32.mrf.mxu0
    %v1585 = vadd.f32 0.0, %v1584
    %v1586 = vpop.f32.mrf.mxu0
    %v1587 = vadd.f32 0.0, %v1586
    %v1588 = vpop.f32.mrf.mxu0
    %v1589 = vadd.f32 0.0, %v1588
    %v1590 = vpop.f32.mrf.mxu0
    %v1591 = vadd.f32 0.0, %v1590
    %1592 = vdwg.mxu0
    %v1593 = vadd.f32 %v1555, %v1557
    %v1594 = vadd.f32 %v1559, %v1561
    %v1595 = vadd.f32 %v1565, %v1567
    %v1596 = vadd.f32 %v1569, %v1571
    %v1597 = vadd.f32 %v1575, %v1577
    %v1598 = vadd.f32 %v1579, %v1581
    %v1599 = vadd.f32 %v1585, %v1587
    %v1600 = vadd.f32 %v1589, %v1591
    %v1601 = vsub.f32 %v1488, %v1593
    %v1602 = vsub.f32 %v1489, %v1594
    %v1603 = vsub.f32 %v1490, %v1595
    %v1604 = vsub.f32 %v1491, %v1596
    %v1605 = vsub.f32 %v1492, %v1597
    %v1606 = vsub.f32 %v1493, %v1598
    %v1607 = vsub.f32 %v1494, %v1599
    %v1608 = vsub.f32 %v1495, %v1600
    %v1609 = vmul.f32 %v704, %v1601
    %v1610 = vmul.f32 %v704, %v1602
    %v1611 = vmul.f32 %v704, %v1603
    %v1612 = vmul.f32 %v704, %v1604
    %v1613 = vmul.f32 %v704, %v1605
    %v1614 = vmul.f32 %v704, %v1606
    %v1615 = vmul.f32 %v704, %v1607
    %v1616 = vmul.f32 %v704, %v1608
    %v1617 = vadd.f32 %v1609, %v534
    %v1618 = vadd.f32 %v1610, %v535
    %v1619 = vadd.f32 %v1611, %v536
    %v1620 = vadd.f32 %v1612, %v537
    %v1621 = vadd.f32 %v1613, %v538
    %v1622 = vadd.f32 %v1614, %v539
    %v1623 = vadd.f32 %v1615, %v540
    %v1624 = vadd.f32 %v1616, %v541
    %v1625 = vpack.c.bf16 %v1618, %v1617
    %v1626 = vpack.c.bf16 %v1620, %v1619
    %v1627 = vpack.c.bf16 %v1622, %v1621
    %v1628 = vpack.c.bf16 %v1624, %v1623
    %v1629 = vunpack.c.l.bf16 %v1625
    %v1630 = vunpack.c.h.bf16 %v1625
    %v1631 = vunpack.c.l.bf16 %v1626
    %v1632 = vunpack.c.h.bf16 %v1626
    %v1633 = vunpack.c.l.bf16 %v1627
    %v1634 = vunpack.c.h.bf16 %v1627
    %v1635 = vunpack.c.l.bf16 %v1628
    %v1636 = vunpack.c.h.bf16 %v1628
    %v1637 = vsub.f32 %v1617, %v1629
    %v1638 = vsub.f32 %v1618, %v1630
    %v1639 = vsub.f32 %v1619, %v1631
    %v1640 = vsub.f32 %v1620, %v1632
    %v1641 = vsub.f32 %v1621, %v1633
    %v1642 = vsub.f32 %v1622, %v1634
    %v1643 = vsub.f32 %v1623, %v1635
    %v1644 = vsub.f32 %v1624, %v1636
    %v1645 = vpack.c.bf16 %v1638, %v1637
    %v1646 = vpack.c.bf16 %v1640, %v1639
    %v1647 = vpack.c.bf16 %v1642, %v1641
    %v1648 = vpack.c.bf16 %v1644, %v1643
    %1649 = vmatprep.subr.bf16.mxu0 0
    %1650 = vmatpush1.bf16.msra.mxu0 0
    %1651 = vmatprep.subr.bf16.mxu0 0
    %1652 = vmatpush1.bf16.msra.mxu0 0
    %1653 = vmatprep.subr.bf16.mxu0 0
    %1654 = vmatpush1.bf16.msra.mxu0 0
    %1655 = vmatprep.subr.bf16.mxu0 0
    %1656 = vmatpush1.bf16.msra.mxu0 0
    %1657 = vmatprep.subr.bf16.mxu0 %v1648
    %1658 = vmatpush1.bf16.msra.mxu0 %v1628
    %1659 = vmatprep.subr.bf16.mxu0 %v1647
    %1660 = vmatpush1.bf16.msra.mxu0 %v1627
    %1661 = vmatprep.subr.bf16.mxu0 %v1646
    %1662 = vmatpush1.bf16.msra.mxu0 %v1626
    %1663 = vmatprep.subr.bf16.mxu0 %v1645
    %1664 = vmatpush1.bf16.msra.mxu0 %v1625
    %1665 = vmatprep.subr.bf16.mxu0 0
    %1666 = vmatpush2.bf16.msra.mxu0 0
    %1667 = vmatprep.subr.bf16.mxu0 0
    %1668 = vmatpush2.bf16.msra.mxu0 0
    %1669 = vmatprep.subr.bf16.mxu0 0
    %1670 = vmatpush2.bf16.msra.mxu0 0
    %1671 = vmatprep.subr.bf16.mxu0 0
    %1672 = vmatpush2.bf16.msra.mxu0 0
    %1673 = vmatprep.subr.bf16.mxu0 0
    %1674 = vmatpush2.bf16.msra.mxu0 0
    %1675 = vmatprep.subr.bf16.mxu0 0
    %1676 = vmatpush2.bf16.msra.mxu0 0
    %1677 = vmatprep.subr.bf16.mxu0 0
    %1678 = vmatpush2.bf16.msra.mxu0 0
    %1679 = vmatprep.subr.bf16.mxu0 0
    %1680 = vmatpush2.bf16.msra.mxu0 0
    %1681 = vmatprep.mubr.bf16.mxu0 0
    %1682 = vmatmul.mubr.bf16.gmra.mxu0 %v600
    %v1683 = vpop.f32.mrf.mxu0
    %v1684 = vadd.f32 0.0, %v1683
    %v1685 = vpop.f32.mrf.mxu0
    %v1686 = vadd.f32 0.0, %v1685
    %v1687 = vpop.f32.mrf.mxu0
    %v1688 = vadd.f32 0.0, %v1687
    %v1689 = vpop.f32.mrf.mxu0
    %v1690 = vadd.f32 0.0, %v1689
    %1691 = vmatprep.mubr.bf16.mxu0 0
    %1692 = vmatmul.mubr.bf16.gmra.mxu0 %v603
    %v1693 = vpop.f32.mrf.mxu0
    %v1694 = vadd.f32 0.0, %v1693
    %v1695 = vpop.f32.mrf.mxu0
    %v1696 = vadd.f32 0.0, %v1695
    %v1697 = vpop.f32.mrf.mxu0
    %v1698 = vadd.f32 0.0, %v1697
    %v1699 = vpop.f32.mrf.mxu0
    %v1700 = vadd.f32 0.0, %v1699
    %1701 = vmatprep.mubr.bf16.mxu0 0
    %1702 = vmatmul.mubr.bf16.gmra.mxu0 %v606
    %v1703 = vpop.f32.mrf.mxu0
    %v1704 = vadd.f32 0.0, %v1703
    %v1705 = vpop.f32.mrf.mxu0
    %v1706 = vadd.f32 0.0, %v1705
    %v1707 = vpop.f32.mrf.mxu0
    %v1708 = vadd.f32 0.0, %v1707
    %v1709 = vpop.f32.mrf.mxu0
    %v1710 = vadd.f32 0.0, %v1709
    %1711 = vmatprep.mubr.bf16.mxu0 0
    %1712 = vmatmul.mubr.bf16.gmra.mxu0 %v609
    %v1713 = vpop.f32.mrf.mxu0
    %v1714 = vadd.f32 0.0, %v1713
    %v1715 = vpop.f32.mrf.mxu0
    %v1716 = vadd.f32 0.0, %v1715
    %v1717 = vpop.f32.mrf.mxu0
    %v1718 = vadd.f32 0.0, %v1717
    %v1719 = vpop.f32.mrf.mxu0
    %v1720 = vadd.f32 0.0, %v1719
    %1721 = vdwg.mxu0
    %v1722 = vadd.f32 %v1684, %v1686
    %v1723 = vadd.f32 %v1688, %v1690
    %v1724 = vadd.f32 %v1694, %v1696
    %v1725 = vadd.f32 %v1698, %v1700
    %v1726 = vadd.f32 %v1704, %v1706
    %v1727 = vadd.f32 %v1708, %v1710
    %v1728 = vadd.f32 %v1714, %v1716
    %v1729 = vadd.f32 %v1718, %v1720
    %v1730 = vsub.f32 %v1617, %v1722
    %v1731 = vsub.f32 %v1618, %v1723
    %v1732 = vsub.f32 %v1619, %v1724
    %v1733 = vsub.f32 %v1620, %v1725
    %v1734 = vsub.f32 %v1621, %v1726
    %v1735 = vsub.f32 %v1622, %v1727
    %v1736 = vsub.f32 %v1623, %v1728
    %v1737 = vsub.f32 %v1624, %v1729
    %v1738 = vmul.f32 %v704, %v1730
    %v1739 = vmul.f32 %v704, %v1731
    %v1740 = vmul.f32 %v704, %v1732
    %v1741 = vmul.f32 %v704, %v1733
    %v1742 = vmul.f32 %v704, %v1734
    %v1743 = vmul.f32 %v704, %v1735
    %v1744 = vmul.f32 %v704, %v1736
    %v1745 = vmul.f32 %v704, %v1737
    %v1746 = vadd.f32 %v1738, %v534
    %v1747 = vadd.f32 %v1739, %v535
    %v1748 = vadd.f32 %v1740, %v536
    %v1749 = vadd.f32 %v1741, %v537
    %v1750 = vadd.f32 %v1742, %v538
    %v1751 = vadd.f32 %v1743, %v539
    %v1752 = vadd.f32 %v1744, %v540
    %v1753 = vadd.f32 %v1745, %v541
    %v1754 = vpack.c.bf16 %v1747, %v1746
    %v1755 = vpack.c.bf16 %v1749, %v1748
    %v1756 = vpack.c.bf16 %v1751, %v1750
    %v1757 = vpack.c.bf16 %v1753, %v1752
    %v1758 = vunpack.c.l.bf16 %v1754
    %v1759 = vunpack.c.h.bf16 %v1754
    %v1760 = vunpack.c.l.bf16 %v1755
    %v1761 = vunpack.c.h.bf16 %v1755
    %v1762 = vunpack.c.l.bf16 %v1756
    %v1763 = vunpack.c.h.bf16 %v1756
    %v1764 = vunpack.c.l.bf16 %v1757
    %v1765 = vunpack.c.h.bf16 %v1757
    %v1766 = vsub.f32 %v1746, %v1758
    %v1767 = vsub.f32 %v1747, %v1759
    %v1768 = vsub.f32 %v1748, %v1760
    %v1769 = vsub.f32 %v1749, %v1761
    %v1770 = vsub.f32 %v1750, %v1762
    %v1771 = vsub.f32 %v1751, %v1763
    %v1772 = vsub.f32 %v1752, %v1764
    %v1773 = vsub.f32 %v1753, %v1765
    %v1774 = vpack.c.bf16 %v1767, %v1766
    %v1775 = vpack.c.bf16 %v1769, %v1768
    %v1776 = vpack.c.bf16 %v1771, %v1770
    %v1777 = vpack.c.bf16 %v1773, %v1772
    %1778 = vmatprep.subr.bf16.mxu0 0
    %1779 = vmatpush1.bf16.msra.mxu0 0
    %1780 = vmatprep.subr.bf16.mxu0 0
    %1781 = vmatpush1.bf16.msra.mxu0 0
    %1782 = vmatprep.subr.bf16.mxu0 0
    %1783 = vmatpush1.bf16.msra.mxu0 0
    %1784 = vmatprep.subr.bf16.mxu0 0
    %1785 = vmatpush1.bf16.msra.mxu0 0
    %1786 = vmatprep.subr.bf16.mxu0 %v1777
    %1787 = vmatpush1.bf16.msra.mxu0 %v1757
    %1788 = vmatprep.subr.bf16.mxu0 %v1776
    %1789 = vmatpush1.bf16.msra.mxu0 %v1756
    %1790 = vmatprep.subr.bf16.mxu0 %v1775
    %1791 = vmatpush1.bf16.msra.mxu0 %v1755
    %1792 = vmatprep.subr.bf16.mxu0 %v1774
    %1793 = vmatpush1.bf16.msra.mxu0 %v1754
    %1794 = vmatprep.subr.bf16.mxu0 0
    %1795 = vmatpush2.bf16.msra.mxu0 0
    %1796 = vmatprep.subr.bf16.mxu0 0
    %1797 = vmatpush2.bf16.msra.mxu0 0
    %1798 = vmatprep.subr.bf16.mxu0 0
    %1799 = vmatpush2.bf16.msra.mxu0 0
    %1800 = vmatprep.subr.bf16.mxu0 0
    %1801 = vmatpush2.bf16.msra.mxu0 0
    %1802 = vmatprep.subr.bf16.mxu0 0
    %1803 = vmatpush2.bf16.msra.mxu0 0
    %1804 = vmatprep.subr.bf16.mxu0 0
    %1805 = vmatpush2.bf16.msra.mxu0 0
    %1806 = vmatprep.subr.bf16.mxu0 0
    %1807 = vmatpush2.bf16.msra.mxu0 0
    %1808 = vmatprep.subr.bf16.mxu0 0
    %1809 = vmatpush2.bf16.msra.mxu0 0
    %1810 = vmatprep.mubr.bf16.mxu0 0
    %1811 = vmatmul.mubr.bf16.gmra.mxu0 %v600
    %v1812 = vpop.f32.mrf.mxu0
    %v1813 = vadd.f32 0.0, %v1812
    %v1814 = vpop.f32.mrf.mxu0
    %v1815 = vadd.f32 0.0, %v1814
    %v1816 = vpop.f32.mrf.mxu0
    %v1817 = vadd.f32 0.0, %v1816
    %v1818 = vpop.f32.mrf.mxu0
    %v1819 = vadd.f32 0.0, %v1818
    %1820 = vmatprep.mubr.bf16.mxu0 0
    %1821 = vmatmul.mubr.bf16.gmra.mxu0 %v603
    %v1822 = vpop.f32.mrf.mxu0
    %v1823 = vadd.f32 0.0, %v1822
    %v1824 = vpop.f32.mrf.mxu0
    %v1825 = vadd.f32 0.0, %v1824
    %v1826 = vpop.f32.mrf.mxu0
    %v1827 = vadd.f32 0.0, %v1826
    %v1828 = vpop.f32.mrf.mxu0
    %v1829 = vadd.f32 0.0, %v1828
    %1830 = vmatprep.mubr.bf16.mxu0 0
    %1831 = vmatmul.mubr.bf16.gmra.mxu0 %v606
    %v1832 = vpop.f32.mrf.mxu0
    %v1833 = vadd.f32 0.0, %v1832
    %v1834 = vpop.f32.mrf.mxu0
    %v1835 = vadd.f32 0.0, %v1834
    %v1836 = vpop.f32.mrf.mxu0
    %v1837 = vadd.f32 0.0, %v1836
    %v1838 = vpop.f32.mrf.mxu0
    %v1839 = vadd.f32 0.0, %v1838
    %1840 = vmatprep.mubr.bf16.mxu0 0
    %1841 = vmatmul.mubr.bf16.gmra.mxu0 %v609
    %v1842 = vpop.f32.mrf.mxu0
    %v1843 = vadd.f32 0.0, %v1842
    %v1844 = vpop.f32.mrf.mxu0
    %v1845 = vadd.f32 0.0, %v1844
    %v1846 = vpop.f32.mrf.mxu0
    %v1847 = vadd.f32 0.0, %v1846
    %v1848 = vpop.f32.mrf.mxu0
    %v1849 = vadd.f32 0.0, %v1848
    %1850 = vdwg.mxu0
    %v1851 = vadd.f32 %v1813, %v1815
    %v1852 = vadd.f32 %v1817, %v1819
    %v1853 = vadd.f32 %v1823, %v1825
    %v1854 = vadd.f32 %v1827, %v1829
    %v1855 = vadd.f32 %v1833, %v1835
    %v1856 = vadd.f32 %v1837, %v1839
    %v1857 = vadd.f32 %v1843, %v1845
    %v1858 = vadd.f32 %v1847, %v1849
    %v1859 = vsub.f32 %v1746, %v1851
    %v1860 = vsub.f32 %v1747, %v1852
    %v1861 = vsub.f32 %v1748, %v1853
    %v1862 = vsub.f32 %v1749, %v1854
    %v1863 = vsub.f32 %v1750, %v1855
    %v1864 = vsub.f32 %v1751, %v1856
    %v1865 = vsub.f32 %v1752, %v1857
    %v1866 = vsub.f32 %v1753, %v1858
    %v1867 = vmul.f32 %v704, %v1859
    %v1868 = vmul.f32 %v704, %v1860
    %v1869 = vmul.f32 %v704, %v1861
    %v1870 = vmul.f32 %v704, %v1862
    %v1871 = vmul.f32 %v704, %v1863
    %v1872 = vmul.f32 %v704, %v1864
    %v1873 = vmul.f32 %v704, %v1865
    %v1874 = vmul.f32 %v704, %v1866
    %v1875 = vadd.f32 %v1867, %v534
    %v1876 = vadd.f32 %v1868, %v535
    %v1877 = vadd.f32 %v1869, %v536
    %v1878 = vadd.f32 %v1870, %v537
    %v1879 = vadd.f32 %v1871, %v538
    %v1880 = vadd.f32 %v1872, %v539
    %v1881 = vadd.f32 %v1873, %v540
    %v1882 = vadd.f32 %v1874, %v541
    %v1883 = vmax.f32 %v1875, 0.0
    %v1884 = vmax.f32 %v1876, 0.0
    %v1885 = vmax.f32 %v1877, 0.0
    %v1886 = vmax.f32 %v1878, 0.0
    %v1887 = vmax.f32 %v1879, 0.0
    %v1888 = vmax.f32 %v1880, 0.0
    %v1889 = vmax.f32 %v1881, 0.0
    %v1890 = vmax.f32 %v1882, 0.0
    %v1891 = vmul.f32 %v1883, %v339
    %v1892 = vmul.f32 %v1884, %v344
    %v1893 = vmul.f32 %v1885, %v349
    %v1894 = vmul.f32 %v1886, %v354
    %v1895 = vmul.f32 %v1887, %v359
    %v1896 = vmul.f32 %v1888, %v364
    %v1897 = vmul.f32 %v1889, %v369
    %v1898 = vmul.f32 %v1890, %v374
    %v1899 = vadd.f32 %v1891, %v1892
    %v1900 = vadd.f32 %v1899, %v1893
    %v1901 = vadd.f32 %v1900, %v1894
    %v1902 = vadd.f32 %v1901, %v1895
    %v1903 = vadd.f32 %v1902, %v1896
    %v1904 = vadd.f32 %v1903, %v1897
    %v1905 = vadd.f32 %v1904, %v1898
    %v1906 = vrot.slane %v1905, 4
    %v1907 = vadd.f32 %v1905, %v1906
    %v1908 = vrot.slane %v1907, 2
    %v1909 = vadd.f32 %v1907, %v1908
    %v1910 = vrot.slane %v1909, 1
    %v1911 = vadd.f32 %v1909, %v1910
    %v1912 = vsel %vm247, %v1911, 0.0
    %1913 = vadd.xlane.f32.xlu0 %v1912
    %v1914 = vpop.xlane.xlu0 %1913
    %v1915 = vadd.f32 %v1914, %v415
    %1917 = vrot.lane.b32.xlu0 %v1911, 96
    %v1918 = vpop.permute.xlu0 %1917
    %v1920 = vsel %vm247, %v1918, 0.0
    %1921 = vadd.xlane.f32.xlu0 %v1920
    %v1922 = vpop.xlane.xlu0 %1921
    %v1923 = vadd.f32 %v1922, %v415
    %1924 = vrot.lane.b32.xlu0 %v1911, 64
    %v1925 = vpop.permute.xlu0 %1924
    %v1927 = vsel %vm247, %v1925, 0.0
    %1928 = vadd.xlane.f32.xlu0 %v1927
    %v1929 = vpop.xlane.xlu0 %1928
    %v1930 = vadd.f32 %v1929, %v415
    %v1931 = vmax.f32 %v1915, %v1923
    %v1932 = vmax.f32 %v1931, %v1930
    %v1933 = vsub.f32 %v1915, %v1932
    %v1934 = vmul.f32 %v1933, 1.442695
    %v1935 = vpow.pop %v1934
    %v1936 = vsub.f32 %v1923, %v1932
    %v1937 = vmul.f32 %v1936, 1.442695
    %v1938 = vpow.pop %v1937
    %v1939 = vsub.f32 %v1930, %v1932
    %v1940 = vmul.f32 %v1939, 1.442695
    %v1941 = vpow.pop %v1940
    %v1942 = vadd.f32 %v1935, %v1938
    %v1943 = vadd.f32 %v1942, %v1941
    %v1944 = vrcp.pop %v1943
    %v1945 = vmul.f32 1.0, %v1944
    %v1946 = vlaneseq
    %v1947 = vand.u32 %v1946, 127
    %vm1948 = vcmp.ge.s32.totalorder %v1947, 0
    %vm1949 = vcmp.lt.s32.totalorder %v1947, 32
    %vm1950 = vmand %vm1948, %vm1949
    %v1951 = vmul.f32 %v1935, %v1945
    %v1952 = vsel %vm1950, %v1951, 0.0
    %v1953 = vadd.f32 %v1952, 0.0
    %vm1954 = vcmp.ge.s32.totalorder %v1947, 32
    %vm1955 = vcmp.lt.s32.totalorder %v1947, 64
    %vm1956 = vmand %vm1954, %vm1955
    %v1957 = vmul.f32 %v1938, %v1945
    %v1958 = vsel %vm1956, %v1957, 0.0
    %v1959 = vadd.f32 %v1953, %v1958
    %vm1960 = vcmp.ge.s32.totalorder %v1947, 64
    %vm1961 = vcmp.lt.s32.totalorder %v1947, 96
    %vm1962 = vmand %vm1960, %vm1961
    %v1963 = vmul.f32 %v1941, %v1945
    %v1964 = vsel %vm1962, %v1963, 0.0
    %v1965 = vadd.f32 %v1959, %v1964
    %v1966 = vmul.f32 %v1883, %v1965
    %v1967 = vmul.f32 %v1884, %v1965
    %v1968 = vmul.f32 %v1885, %v1965
    %v1969 = vmul.f32 %v1886, %v1965
    %v1970 = vmul.f32 %v1887, %v1965
    %v1971 = vmul.f32 %v1888, %v1965
    %v1972 = vmul.f32 %v1889, %v1965
    %v1973 = vmul.f32 %v1890, %v1965
    %1974 = vst [vmem:[#allocation7] sm:$0xff] %v1966
    %1975 = vst [vmem:[#allocation7 + $0x8] sm:$0xff] %v1967
    %1976 = vst [vmem:[#allocation7 + $0x10] sm:$0xff] %v1968
    %1977 = vst [vmem:[#allocation7 + $0x18] sm:$0xff] %v1969
    %1978 = vst [vmem:[#allocation7 + $0x20] sm:$0xff] %v1970
    %1979 = vst [vmem:[#allocation7 + $0x28] sm:$0xff] %v1971
    %1980 = vst [vmem:[#allocation7 + $0x30] sm:$0xff] %v1972
    %1981 = vst [vmem:[#allocation7 + $0x38] sm:$0xff] %v1973
    // Predicated region
    $region72: #{tpu_custom_call.1} parent=1 // pred_check
      _
    $region73: #{tpu_custom_call.1} parent=1 // pred_check_branch
      %1983 = sbr.rel (0) target = $region75
    $region74: #{tpu_custom_call.1} parent=1 // pred_region
      %s1985 = ssub.s32 1024, 1024
      %1986 = vsyncadd [#allocation6], %s1985
      %s1987 = sshll.u32 [#allocation7], 4
      %s1988 = int_to_ptr.vmem [resolvable:$true] %s1987
      %1993 = dma.vmem_to_hbm [thread:$0]  %s1988, 1024, %s9, [#allocation6], 128, 128, 8
    $region75: #{tpu_custom_call.1} parent=1 // pred_fallthru
      _
    // Predicated region
    $region76: #{tpu_custom_call.1} parent=1 // pred_check
      _
    $region77: #{tpu_custom_call.1} parent=1 // pred_check_branch
      %1995 = sbr.rel (0) target = $region79
    $region78: #{tpu_custom_call.1} parent=1 // pred_region
      %1996 = dma.done [#allocation6], 1024
    $region79: #{tpu_custom_call.1} parent=1 // pred_fallthru
      _
    %1997 = vsyncpa [#allocation5], 1
    %1998 = vsyncpa [#allocation6], 1
  %1999 = vsyncmov [#allocation3]
  %s2000 = vpop.sfrf %1999
  %p2001 = scmp.eq.s32.totalorder %s2000, 0
  %p2002 = pneg %p2001
  %2004 = shalt.err (%p2002)

</llo_original>
